<compile_context>
chip_gen: v7x
topology: tpu7x:2x2x1
jax: 0.10.0
libtpu: 0.0.40
codegen_flags: <defaults>
</compile_context>

<pallas_src>
import jax
import jax.numpy as jnp
from jax import lax
from jax.experimental import pallas as pl
from jax.experimental.pallas import tpu as pltpu


def _round_up(x, m):
    return ((x + m - 1) // m) * m


def _vmem_limit_bytes():
    """Per-generation scoped-VMEM limit: ~0.75x physical per-core VMEM
    (96 MiB on 128-MiB v5e/v6e parts, 48 MiB on 64-MiB v7x)."""
    cap = 64 * 1024 * 1024  # conservative fallback == v7x per-core VMEM
    try:
        info_cap = int(pltpu.get_tpu_info().vmem_capacity_bytes)
        if info_cap > 0:
            cap = info_cap
    except Exception:
        pass
    return min(int(cap * 0.75), 100 * 1024 * 1024)


def _pick_tiles(cin, b, cout_p, fp, budget_bytes, x_buffers):
    """Choose (TCo, TFp) grid tiles: biggest footprint that fits the budget.

    In-kernel accumulators are chunk-sized (register-resident) so they are no
    longer part of this footprint.  Best-effort split into >=2 grid steps so
    v7x's second TensorCore gets work.
    """

    def footprint(tco, tfp):
        x_b = 2 * cin * b * tfp * 4 * x_buffers     # xr+xi
        w_b = 2 * cin * tco * tfp * 4 * 2           # wr+wi, double-buffered
        y_b = 2 * b * tco * tfp * 4 * 2             # yr+yi, double-buffered
        return x_b + w_b + y_b

    co_opts = sorted((c for c in range(8, cout_p + 1, 8) if cout_p % c == 0),
                     reverse=True)
    f_units = fp // 128
    f_opts = sorted((u * 128 for u in range(1, f_units + 1)
                     if f_units % u == 0 and u * 128 <= 2048),
                    reverse=True)
    if not f_opts:
        f_opts = [128]

    best = None
    for tco in co_opts:
        for tfp in f_opts:
            if footprint(tco, tfp) <= budget_bytes:
                if best is None or tco * tfp > best[0] * best[1]:
                    best = (tco, tfp)
    if best is None:                      # pathological configs: smallest tile
        best = (co_opts[-1], f_opts[-1])
    tco, tfp = best

    # v7x megacore: ensure >=2 "parallel" grid steps whenever splittable.
    if (cout_p // tco) * (fp // tfp) < 2:
        if len(co_opts) > 1:
            tco = max(c for c in co_opts if c < cout_p)
        elif len(f_opts) > 1:
            tfp = max(u for u in f_opts if u < tfp)
    return tco, tfp


def _spectral_mix_kernel(xr_ref, xi_ref, wr_ref, wi_ref, yr_ref, yi_ref):
    """Complex channel mixing  Y[b,o,f] = sum_i X[i,b,f] * W[i,o,f].

    Block shapes for one grid step:
      xr/xi : (Cin, B, TFp)   wr/wi : (Cin, TCo, TFp)   yr/yi : (B, TCo, TFp)

    The output tile is processed in register-resident chunks of
    (B, co_chunk<=8, f_chunk) so the two f32 accumulators never round-trip
    through VMEM; the Cin reduction runs per chunk with a capped unroll.
    """
    cin, b, tf = xr_ref.shape
    tco = wr_ref.shape[1]

    co_chunk = min(tco, 8)
    f_chunk = 128
    for cand in (1024, 512, 256):
        # keep acc_r + acc_i within ~24 vregs (96 KiB)
        if tf % cand == 0 and 2 * b * co_chunk * cand * 4 <= 96 * 1024:
            f_chunk = cand
            break
    n_co = tco // co_chunk
    n_f = tf // f_chunk
    cin_unroll = max(1, min(cin, 8))

    def compute_chunk(c):
        co0 = 0 if n_co == 1 else pl.multiple_of((c // n_f) * co_chunk, co_chunk)
        f0 = 0 if n_f == 1 else pl.multiple_of((c % n_f) * f_chunk, f_chunk)

        def cin_body(i, carry):
            acc_r, acc_i = carry
            # x is the small operand: its sublane splat across co_chunk is the
            # cheap one; w's size-1 broadcast sits on the leading (B) dim of
            # the larger operand, which is free vreg reuse.
            xr = xr_ref[i, :, pl.ds(f0, f_chunk)][:, None, :]            # (B,1,Fc)
            xi = xi_ref[i, :, pl.ds(f0, f_chunk)][:, None, :]
            wr = wr_ref[i, pl.ds(co0, co_chunk), pl.ds(f0, f_chunk)][None]  # (1,Co,Fc)
            wi = wi_ref[i, pl.ds(co0, co_chunk), pl.ds(f0, f_chunk)][None]
            acc_r = acc_r + (xr * wr - xi * wi)
            acc_i = acc_i + (xr * wi + xi * wr)
            return acc_r, acc_i

        zero = jnp.zeros((b, co_chunk, f_chunk), jnp.float32)
        acc_r, acc_i = lax.fori_loop(0, cin, cin_body, (zero, zero),
                                     unroll=cin_unroll)
        yr_ref[:, pl.ds(co0, co_chunk), pl.ds(f0, f_chunk)] = acc_r
        yi_ref[:, pl.ds(co0, co_chunk), pl.ds(f0, f_chunk)] = acc_i

    if n_co * n_f == 1:
        compute_chunk(0)
    else:
        def chunk_body(c, carry):
            compute_chunk(c)
            return carry

        lax.fori_loop(0, n_co * n_f, chunk_body, 0)


def _spectral_mix_call(xr, xi, wr, wi, *, single_buffer_x):
    cin, b, fp = xr.shape
    cout_p = wr.shape[1]
    assert fp % 128 == 0, "lane axis must be padded to a multiple of 128"
    assert cout_p % 8 == 0, "Cout must be padded to a multiple of 8"

    vmem_limit = _vmem_limit_bytes()
    budget = int(vmem_limit * 0.75)
    x_buffers = 1 if single_buffer_x else 2
    tco, tfp = _pick_tiles(cin, b, cout_p, fp, budget, x_buffers)
    # Fp-major grid so x is only re-DMAed when the lane tile changes
    # (Cout is the inner axis and x is invariant across it).
    grid = (fp // tfp, cout_p // tco)

    x_kwargs = dict(pipeline_mode=pl.Buffered(1)) if single_buffer_x else {}
    x_spec = pl.BlockSpec((cin, b, tfp), lambda fi, oi: (0, 0, fi), **x_kwargs)
    w_spec = pl.BlockSpec((cin, tco, tfp), lambda fi, oi: (0, oi, fi))
    y_spec = pl.BlockSpec((b, tco, tfp), lambda fi, oi: (0, oi, fi))

    flops = 8 * b * cin * cout_p * fp          # 4 mul + 4 add per complex MAC
    bytes_accessed = 4 * (2 * cin * b * fp + 2 * cin * cout_p * fp
                          + 2 * b * cout_p * fp)

    return pl.pallas_call(
        _spectral_mix_kernel,
        out_shape=(
            jax.ShapeDtypeStruct((b, cout_p, fp), jnp.float32),
            jax.ShapeDtypeStruct((b, cout_p, fp), jnp.float32),
        ),
        grid_spec=pltpu.PrefetchScalarGridSpec(
            num_scalar_prefetch=0,
            grid=grid,
            in_specs=[x_spec, x_spec, w_spec, w_spec],
            out_specs=(y_spec, y_spec),
        ),
        compiler_params=pltpu.CompilerParams(
            dimension_semantics=("parallel", "parallel"),
            vmem_limit_bytes=vmem_limit,
        ),
        cost_estimate=pl.CostEstimate(
            flops=flops, transcendentals=0, bytes_accessed=bytes_accessed),
    )(xr, xi, wr, wi)


def spectral_mix(xr, xi, wr, wi):
    """xr/xi: (Cin,B,Fp) f32, wr/wi: (Cin,Cout_p,Fp) f32 -> (B,Cout_p,Fp) x2."""
    try:
        return _spectral_mix_call(xr, xi, wr, wi, single_buffer_x=True)
    except Exception:
        # Fallback for jax versions where pipeline_mode=pl.Buffered(1) is not
        # supported: default double-buffered x (slightly higher VMEM use).
        return _spectral_mix_call(xr, xi, wr, wi, single_buffer_x=False)


class SpectralConv2d:
    """JAX/Pallas port of the PyTorch SpectralConv2d module (forward only)."""

    def __init__(self, in_channels, out_channels, modes1, modes2, key):
        self.in_channels = in_channels
        self.out_channels = out_channels
        self.modes1 = modes1
        self.modes2 = modes2
        scale = 1.0 / (in_channels * out_channels)
        k1, k2, k3, k4 = jax.random.split(key, 4)
        shape = (in_channels, out_channels, modes1, modes2)
        # torch.rand(..., dtype=torch.cfloat): real & imag ~ U[0,1), scaled.
        self.w1 = scale * (
            jax.random.uniform(k1, shape, jnp.float32)
            + 1j * jax.random.uniform(k2, shape, jnp.float32)
        ).astype(jnp.complex64)
        self.w2 = scale * (
            jax.random.uniform(k3, shape, jnp.float32)
            + 1j * jax.random.uniform(k4, shape, jnp.float32)
        ).astype(jnp.complex64)

        # Kernel-side weight planes, computed ONCE (not per forward):
        # both mode corners concatenated on the lane axis, real/imag split,
        # lanes padded to a multiple of 128, Cout padded to a multiple of 8.
        f = 2 * modes1 * modes2
        fp = _round_up(max(f, 128), 128)
        cout_p = _round_up(max(out_channels, 8), 8)
        self._f, self._fp, self._cout_p = f, fp, cout_p
        w_cat = jnp.concatenate(
            [
                self.w1.reshape(in_channels, out_channels, modes1 * modes2),
                self.w2.reshape(in_channels, out_channels, modes1 * modes2),
            ],
            axis=-1,
        )  # (Cin, Cout, F) complex64
        pad = ((0, 0), (0, cout_p - out_channels), (0, fp - f))
        self._wr = jnp.pad(jnp.real(w_cat).astype(jnp.float32), pad)
        self._wi = jnp.pad(jnp.imag(w_cat).astype(jnp.float32), pad)
        # TODO(synk): optionally store _wr/_wi as bf16 (halves weight DMA)
        # once accuracy vs the complex64 reference is validated.

    def __call__(self, x):
        # x: (B, Cin, H, W) float32  (NCHW, matching PyTorch)
        B, Cin, H, W = x.shape
        m1, m2 = self.modes1, self.modes2
        Cout = self.out_channels
        f, fp = self._f, self._fp

        # TODO(synk): rfft2/irfft2 have no Pallas primitive; they stay XLA ops.
        x_ft = jnp.fft.rfft2(x)  # (B, Cin, H, W//2+1) complex64

        # Retained mode corners flattened onto the lane axis, Cin leading so
        # the kernel's Cin reduction indexes the cheap leading dim.
        x_top = x_ft[:, :, :m1, :m2].reshape(B, Cin, m1 * m2)
        x_bot = x_ft[:, :, H - m1:, :m2].reshape(B, Cin, m1 * m2)
        x_modes = jnp.concatenate([x_top, x_bot], axis=-1)       # (B, Cin, F)
        x_modes = jnp.transpose(x_modes, (1, 0, 2))              # (Cin, B, F)
        pad = ((0, 0), (0, 0), (0, fp - f))
        xr = jnp.pad(jnp.real(x_modes).astype(jnp.float32), pad)
        xi = jnp.pad(jnp.imag(x_modes).astype(jnp.float32), pad)

        yr, yi = spectral_mix(xr, xi, self._wr, self._wi)   # (B, Cout_p, Fp)

        y = (yr[:, :Cout, :f] + 1j * yi[:, :Cout, :f]).astype(jnp.complex64)
        y_top = y[:, :, : m1 * m2].reshape(B, Cout, m1, m2)
        y_bot = y[:, :, m1 * m2:].reshape(B, Cout, m1, m2)

        # TODO(synk): complex corner scatter stays as jnp .at[].set — Pallas
        # TPU refs do not support complex64 outputs.
        Wf = W // 2 + 1
        out_ft = jnp.zeros((B, Cout, H, Wf), dtype=jnp.complex64)
        out_ft = out_ft.at[:, :, :m1, :m2].set(y_top)
        out_ft = out_ft.at[:, :, H - m1:, :m2].set(y_bot)

        return jnp.fft.irfft2(out_ft, s=(H, W))  # (B, Cout, H, W) float32


def _reference_forward(x, w1, w2, m1, m2):
    """Pure-JAX reference mirroring the PyTorch forward (for verification)."""
    B, Cin, H, W = x.shape
    Cout = w1.shape[1]
    x_ft = jnp.fft.rfft2(x)
    out_ft = jnp.zeros((B, Cout, H, W // 2 + 1), dtype=jnp.complex64)
    out_ft = out_ft.at[:, :, :m1, :m2].set(
        jnp.einsum("bixy,ioxy->boxy", x_ft[:, :, :m1, :m2], w1)
    )
    out_ft = out_ft.at[:, :, H - m1:, :m2].set(
        jnp.einsum("bixy,ioxy->boxy", x_ft[:, :, H - m1:, :m2], w2)
    )
    return jnp.fft.irfft2(out_ft, s=(H, W))


if __name__ == "__main__":
    key = jax.random.PRNGKey(0)
    k_x, k_w = jax.random.split(key)

    B, Cin, Cout, H, W = 2, 4, 4, 16, 16
    modes1, modes2 = 4, 4

    x = jax.random.normal(k_x, (B, Cin, H, W), dtype=jnp.float32)

    layer = SpectralConv2d(Cin, Cout, modes1, modes2, k_w)
    out = jax.block_until_ready(layer(x))

    ref = jax.block_until_ready(
        _reference_forward(x, layer.w1, layer.w2, modes1, modes2)
    )

    assert out.shape == (B, Cout, H, W)
    assert jnp.allclose(out, ref, atol=1e-5, rtol=1e-5)

    print("KERNEL_OK")
</pallas_src>

<mosaic_0001>
module attributes {stable_mosaic.version = 11 : i64} {
  func.func @_spectral_mix_kernel(%arg0: i32, %arg1: i32, %arg2: memref<4x2x128xf32, #tpu.memory_space<vmem>>, %arg3: memref<4x2x128xf32, #tpu.memory_space<vmem>>, %arg4: memref<4x8x128xf32, #tpu.memory_space<vmem>>, %arg5: memref<4x8x128xf32, #tpu.memory_space<vmem>>, %arg6: memref<2x8x128xf32, #tpu.memory_space<vmem>>, %arg7: memref<2x8x128xf32, #tpu.memory_space<vmem>>) attributes {dimension_semantics = [#tpu.dimension_semantics<parallel>, #tpu.dimension_semantics<parallel>], iteration_bounds = array<i64: 1, 1>, scalar_prefetch = 0 : i64, scratch_operands = 0 : i64, tpu.core_type = #tpu.core_type<tc>, window_params = [{pipeline_mode = #tpu.pipeline_mode<synchronous>, transform_indices = @transform_0, window_bounds = array<i64: 4, 2, 128>}, {pipeline_mode = #tpu.pipeline_mode<synchronous>, transform_indices = @transform_1, window_bounds = array<i64: 4, 2, 128>}, {transform_indices = @transform_2, window_bounds = array<i64: 4, 8, 128>}, {transform_indices = @transform_3, window_bounds = array<i64: 4, 8, 128>}, {transform_indices = @transform_4, window_bounds = array<i64: 2, 8, 128>}, {transform_indices = @transform_5, window_bounds = array<i64: 2, 8, 128>}]} {
    %cst = arith.constant 0.000000e+00 : f32
    %0 = vector.broadcast %cst : f32 to vector<2x8x128xf32>
    %c0_i32 = arith.constant 0 : i32
    %1 = arith.index_cast %c0_i32 : i32 to index
    %c0 = arith.constant 0 : index
    %c0_0 = arith.constant 0 : index
    %2 = vector.load %arg2[%1, %c0, %c0_0] : memref<4x2x128xf32, #tpu.memory_space<vmem>>, vector<1x2x128xf32>
    %3 = vector.shape_cast %2 : vector<1x2x128xf32> to vector<2x128xf32>
    %4 = vector.shape_cast %3 : vector<2x128xf32> to vector<2x1x128xf32>
    %5 = arith.index_cast %c0_i32 : i32 to index
    %c0_1 = arith.constant 0 : index
    %c0_2 = arith.constant 0 : index
    %6 = vector.load %arg3[%5, %c0_1, %c0_2] : memref<4x2x128xf32, #tpu.memory_space<vmem>>, vector<1x2x128xf32>
    %7 = vector.shape_cast %6 : vector<1x2x128xf32> to vector<2x128xf32>
    %8 = vector.shape_cast %7 : vector<2x128xf32> to vector<2x1x128xf32>
    %9 = arith.index_cast %c0_i32 : i32 to index
    %c0_3 = arith.constant 0 : index
    %c0_4 = arith.constant 0 : index
    %10 = vector.load %arg4[%9, %c0_3, %c0_4] : memref<4x8x128xf32, #tpu.memory_space<vmem>>, vector<1x8x128xf32>
    %11 = vector.shape_cast %10 : vector<1x8x128xf32> to vector<8x128xf32>
    %12 = vector.shape_cast %11 : vector<8x128xf32> to vector<1x8x128xf32>
    %13 = arith.index_cast %c0_i32 : i32 to index
    %c0_5 = arith.constant 0 : index
    %c0_6 = arith.constant 0 : index
    %14 = vector.load %arg5[%13, %c0_5, %c0_6] : memref<4x8x128xf32, #tpu.memory_space<vmem>>, vector<1x8x128xf32>
    %15 = vector.shape_cast %14 : vector<1x8x128xf32> to vector<8x128xf32>
    %16 = vector.shape_cast %15 : vector<8x128xf32> to vector<1x8x128xf32>
    %17 = vector.broadcast %4 : vector<2x1x128xf32> to vector<2x8x128xf32>
    %18 = vector.broadcast %12 : vector<1x8x128xf32> to vector<2x8x128xf32>
    %19 = arith.mulf %17, %18 : vector<2x8x128xf32>
    %20 = vector.broadcast %8 : vector<2x1x128xf32> to vector<2x8x128xf32>
    %21 = vector.broadcast %16 : vector<1x8x128xf32> to vector<2x8x128xf32>
    %22 = arith.mulf %20, %21 : vector<2x8x128xf32>
    %23 = arith.subf %19, %22 : vector<2x8x128xf32>
    %24 = arith.addf %0, %23 : vector<2x8x128xf32>
    %25 = vector.broadcast %4 : vector<2x1x128xf32> to vector<2x8x128xf32>
    %26 = vector.broadcast %16 : vector<1x8x128xf32> to vector<2x8x128xf32>
    %27 = arith.mulf %25, %26 : vector<2x8x128xf32>
    %28 = vector.broadcast %8 : vector<2x1x128xf32> to vector<2x8x128xf32>
    %29 = vector.broadcast %12 : vector<1x8x128xf32> to vector<2x8x128xf32>
    %30 = arith.mulf %28, %29 : vector<2x8x128xf32>
    %31 = arith.addf %27, %30 : vector<2x8x128xf32>
    %32 = arith.addf %0, %31 : vector<2x8x128xf32>
    %c1_i32 = arith.constant 1 : i32
    %33 = arith.index_cast %c1_i32 : i32 to index
    %c0_7 = arith.constant 0 : index
    %c0_8 = arith.constant 0 : index
    %34 = vector.load %arg2[%33, %c0_7, %c0_8] : memref<4x2x128xf32, #tpu.memory_space<vmem>>, vector<1x2x128xf32>
    %35 = vector.shape_cast %34 : vector<1x2x128xf32> to vector<2x128xf32>
    %36 = vector.shape_cast %35 : vector<2x128xf32> to vector<2x1x128xf32>
    %37 = arith.index_cast %c1_i32 : i32 to index
    %c0_9 = arith.constant 0 : index
    %c0_10 = arith.constant 0 : index
    %38 = vector.load %arg3[%37, %c0_9, %c0_10] : memref<4x2x128xf32, #tpu.memory_space<vmem>>, vector<1x2x128xf32>
    %39 = vector.shape_cast %38 : vector<1x2x128xf32> to vector<2x128xf32>
    %40 = vector.shape_cast %39 : vector<2x128xf32> to vector<2x1x128xf32>
    %41 = arith.index_cast %c1_i32 : i32 to index
    %c0_11 = arith.constant 0 : index
    %c0_12 = arith.constant 0 : index
    %42 = vector.load %arg4[%41, %c0_11, %c0_12] : memref<4x8x128xf32, #tpu.memory_space<vmem>>, vector<1x8x128xf32>
    %43 = vector.shape_cast %42 : vector<1x8x128xf32> to vector<8x128xf32>
    %44 = vector.shape_cast %43 : vector<8x128xf32> to vector<1x8x128xf32>
    %45 = arith.index_cast %c1_i32 : i32 to index
    %c0_13 = arith.constant 0 : index
    %c0_14 = arith.constant 0 : index
    %46 = vector.load %arg5[%45, %c0_13, %c0_14] : memref<4x8x128xf32, #tpu.memory_space<vmem>>, vector<1x8x128xf32>
    %47 = vector.shape_cast %46 : vector<1x8x128xf32> to vector<8x128xf32>
    %48 = vector.shape_cast %47 : vector<8x128xf32> to vector<1x8x128xf32>
    %49 = vector.broadcast %36 : vector<2x1x128xf32> to vector<2x8x128xf32>
    %50 = vector.broadcast %44 : vector<1x8x128xf32> to vector<2x8x128xf32>
    %51 = arith.mulf %49, %50 : vector<2x8x128xf32>
    %52 = vector.broadcast %40 : vector<2x1x128xf32> to vector<2x8x128xf32>
    %53 = vector.broadcast %48 : vector<1x8x128xf32> to vector<2x8x128xf32>
    %54 = arith.mulf %52, %53 : vector<2x8x128xf32>
    %55 = arith.subf %51, %54 : vector<2x8x128xf32>
    %56 = arith.addf %24, %55 : vector<2x8x128xf32>
    %57 = vector.broadcast %36 : vector<2x1x128xf32> to vector<2x8x128xf32>
    %58 = vector.broadcast %48 : vector<1x8x128xf32> to vector<2x8x128xf32>
    %59 = arith.mulf %57, %58 : vector<2x8x128xf32>
    %60 = vector.broadcast %40 : vector<2x1x128xf32> to vector<2x8x128xf32>
    %61 = vector.broadcast %44 : vector<1x8x128xf32> to vector<2x8x128xf32>
    %62 = arith.mulf %60, %61 : vector<2x8x128xf32>
    %63 = arith.addf %59, %62 : vector<2x8x128xf32>
    %64 = arith.addf %32, %63 : vector<2x8x128xf32>
    %c2_i32 = arith.constant 2 : i32
    %65 = arith.index_cast %c2_i32 : i32 to index
    %c0_15 = arith.constant 0 : index
    %c0_16 = arith.constant 0 : index
    %66 = vector.load %arg2[%65, %c0_15, %c0_16] : memref<4x2x128xf32, #tpu.memory_space<vmem>>, vector<1x2x128xf32>
    %67 = vector.shape_cast %66 : vector<1x2x128xf32> to vector<2x128xf32>
    %68 = vector.shape_cast %67 : vector<2x128xf32> to vector<2x1x128xf32>
    %69 = arith.index_cast %c2_i32 : i32 to index
    %c0_17 = arith.constant 0 : index
    %c0_18 = arith.constant 0 : index
    %70 = vector.load %arg3[%69, %c0_17, %c0_18] : memref<4x2x128xf32, #tpu.memory_space<vmem>>, vector<1x2x128xf32>
    %71 = vector.shape_cast %70 : vector<1x2x128xf32> to vector<2x128xf32>
    %72 = vector.shape_cast %71 : vector<2x128xf32> to vector<2x1x128xf32>
    %73 = arith.index_cast %c2_i32 : i32 to index
    %c0_19 = arith.constant 0 : index
    %c0_20 = arith.constant 0 : index
    %74 = vector.load %arg4[%73, %c0_19, %c0_20] : memref<4x8x128xf32, #tpu.memory_space<vmem>>, vector<1x8x128xf32>
    %75 = vector.shape_cast %74 : vector<1x8x128xf32> to vector<8x128xf32>
    %76 = vector.shape_cast %75 : vector<8x128xf32> to vector<1x8x128xf32>
    %77 = arith.index_cast %c2_i32 : i32 to index
    %c0_21 = arith.constant 0 : index
    %c0_22 = arith.constant 0 : index
    %78 = vector.load %arg5[%77, %c0_21, %c0_22] : memref<4x8x128xf32, #tpu.memory_space<vmem>>, vector<1x8x128xf32>
    %79 = vector.shape_cast %78 : vector<1x8x128xf32> to vector<8x128xf32>
    %80 = vector.shape_cast %79 : vector<8x128xf32> to vector<1x8x128xf32>
    %81 = vector.broadcast %68 : vector<2x1x128xf32> to vector<2x8x128xf32>
    %82 = vector.broadcast %76 : vector<1x8x128xf32> to vector<2x8x128xf32>
    %83 = arith.mulf %81, %82 : vector<2x8x128xf32>
    %84 = vector.broadcast %72 : vector<2x1x128xf32> to vector<2x8x128xf32>
    %85 = vector.broadcast %80 : vector<1x8x128xf32> to vector<2x8x128xf32>
    %86 = arith.mulf %84, %85 : vector<2x8x128xf32>
    %87 = arith.subf %83, %86 : vector<2x8x128xf32>
    %88 = arith.addf %56, %87 : vector<2x8x128xf32>
    %89 = vector.broadcast %68 : vector<2x1x128xf32> to vector<2x8x128xf32>
    %90 = vector.broadcast %80 : vector<1x8x128xf32> to vector<2x8x128xf32>
    %91 = arith.mulf %89, %90 : vector<2x8x128xf32>
    %92 = vector.broadcast %72 : vector<2x1x128xf32> to vector<2x8x128xf32>
    %93 = vector.broadcast %76 : vector<1x8x128xf32> to vector<2x8x128xf32>
    %94 = arith.mulf %92, %93 : vector<2x8x128xf32>
    %95 = arith.addf %91, %94 : vector<2x8x128xf32>
    %96 = arith.addf %64, %95 : vector<2x8x128xf32>
    %c3_i32 = arith.constant 3 : i32
    %97 = arith.index_cast %c3_i32 : i32 to index
    %c0_23 = arith.constant 0 : index
    %c0_24 = arith.constant 0 : index
    %98 = vector.load %arg2[%97, %c0_23, %c0_24] : memref<4x2x128xf32, #tpu.memory_space<vmem>>, vector<1x2x128xf32>
    %99 = vector.shape_cast %98 : vector<1x2x128xf32> to vector<2x128xf32>
    %100 = vector.shape_cast %99 : vector<2x128xf32> to vector<2x1x128xf32>
    %101 = arith.index_cast %c3_i32 : i32 to index
    %c0_25 = arith.constant 0 : index
    %c0_26 = arith.constant 0 : index
    %102 = vector.load %arg3[%101, %c0_25, %c0_26] : memref<4x2x128xf32, #tpu.memory_space<vmem>>, vector<1x2x128xf32>
    %103 = vector.shape_cast %102 : vector<1x2x128xf32> to vector<2x128xf32>
    %104 = vector.shape_cast %103 : vector<2x128xf32> to vector<2x1x128xf32>
    %105 = arith.index_cast %c3_i32 : i32 to index
    %c0_27 = arith.constant 0 : index
    %c0_28 = arith.constant 0 : index
    %106 = vector.load %arg4[%105, %c0_27, %c0_28] : memref<4x8x128xf32, #tpu.memory_space<vmem>>, vector<1x8x128xf32>
    %107 = vector.shape_cast %106 : vector<1x8x128xf32> to vector<8x128xf32>
    %108 = vector.shape_cast %107 : vector<8x128xf32> to vector<1x8x128xf32>
    %109 = arith.index_cast %c3_i32 : i32 to index
    %c0_29 = arith.constant 0 : index
    %c0_30 = arith.constant 0 : index
    %110 = vector.load %arg5[%109, %c0_29, %c0_30] : memref<4x8x128xf32, #tpu.memory_space<vmem>>, vector<1x8x128xf32>
    %111 = vector.shape_cast %110 : vector<1x8x128xf32> to vector<8x128xf32>
    %112 = vector.shape_cast %111 : vector<8x128xf32> to vector<1x8x128xf32>
    %113 = vector.broadcast %100 : vector<2x1x128xf32> to vector<2x8x128xf32>
    %114 = vector.broadcast %108 : vector<1x8x128xf32> to vector<2x8x128xf32>
    %115 = arith.mulf %113, %114 : vector<2x8x128xf32>
    %116 = vector.broadcast %104 : vector<2x1x128xf32> to vector<2x8x128xf32>
    %117 = vector.broadcast %112 : vector<1x8x128xf32> to vector<2x8x128xf32>
    %118 = arith.mulf %116, %117 : vector<2x8x128xf32>
    %119 = arith.subf %115, %118 : vector<2x8x128xf32>
    %120 = arith.addf %88, %119 : vector<2x8x128xf32>
    %121 = vector.broadcast %100 : vector<2x1x128xf32> to vector<2x8x128xf32>
    %122 = vector.broadcast %112 : vector<1x8x128xf32> to vector<2x8x128xf32>
    %123 = arith.mulf %121, %122 : vector<2x8x128xf32>
    %124 = vector.broadcast %104 : vector<2x1x128xf32> to vector<2x8x128xf32>
    %125 = vector.broadcast %108 : vector<1x8x128xf32> to vector<2x8x128xf32>
    %126 = arith.mulf %124, %125 : vector<2x8x128xf32>
    %127 = arith.addf %123, %126 : vector<2x8x128xf32>
    %128 = arith.addf %96, %127 : vector<2x8x128xf32>
    %c4_i32 = arith.constant 4 : i32
    %c0_31 = arith.constant 0 : index
    %c0_32 = arith.constant 0 : index
    %c0_33 = arith.constant 0 : index
    %129 = vector.load %arg6[%c0_31, %c0_32, %c0_33] : memref<2x8x128xf32, #tpu.memory_space<vmem>>, vector<2x8x128xf32>
    tpu.vector_store %arg6[%c0_31, %c0_32, %c0_33], %120 {strides = array<i32>} : memref<2x8x128xf32, #tpu.memory_space<vmem>>, vector<2x8x128xf32>,
    %c0_34 = arith.constant 0 : index
    %c0_35 = arith.constant 0 : index
    %c0_36 = arith.constant 0 : index
    %130 = vector.load %arg7[%c0_34, %c0_35, %c0_36] : memref<2x8x128xf32, #tpu.memory_space<vmem>>, vector<2x8x128xf32>
    tpu.vector_store %arg7[%c0_34, %c0_35, %c0_36], %128 {strides = array<i32>} : memref<2x8x128xf32, #tpu.memory_space<vmem>>, vector<2x8x128xf32>,
    return
  }
  func.func @transform_0(%arg0: i32, %arg1: i32) -> (i32, i32, i32) {
    %c0_i32 = arith.constant 0 : i32
    %c0_i32_0 = arith.constant 0 : i32
    %c0_i32_1 = arith.constant 0 : i32
    return %c0_i32, %c0_i32_0, %arg0 : i32, i32, i32
  }
  func.func @transform_1(%arg0: i32, %arg1: i32) -> (i32, i32, i32) {
    %c0_i32 = arith.constant 0 : i32
    %c0_i32_0 = arith.constant 0 : i32
    %c0_i32_1 = arith.constant 0 : i32
    return %c0_i32, %c0_i32_0, %arg0 : i32, i32, i32
  }
  func.func @transform_2(%arg0: i32, %arg1: i32) -> (i32, i32, i32) {
    %c0_i32 = arith.constant 0 : i32
    %c0_i32_0 = arith.constant 0 : i32
    return %c0_i32, %arg1, %arg0 : i32, i32, i32
  }
  func.func @transform_3(%arg0: i32, %arg1: i32) -> (i32, i32, i32) {
    %c0_i32 = arith.constant 0 : i32
    %c0_i32_0 = arith.constant 0 : i32
    return %c0_i32, %arg1, %arg0 : i32, i32, i32
  }
  func.func @transform_4(%arg0: i32, %arg1: i32) -> (i32, i32, i32) {
    %c0_i32 = arith.constant 0 : i32
    %c0_i32_0 = arith.constant 0 : i32
    return %c0_i32, %arg1, %arg0 : i32, i32, i32
  }
  func.func @transform_5(%arg0: i32, %arg1: i32) -> (i32, i32, i32) {
    %c0_i32 = arith.constant 0 : i32
    %c0_i32_0 = arith.constant 0 : i32
    return %c0_i32, %arg1, %arg0 : i32, i32, i32
  }
}

module attributes {stable_mosaic.version = 11 : i64} {
  func.func @_spectral_mix_kernel(%arg0: i32, %arg1: i32, %arg2: memref<4x2x128xf32, #tpu.memory_space<vmem>>, %arg3: memref<4x2x128xf32, #tpu.memory_space<vmem>>, %arg4: memref<4x8x128xf32, #tpu.memory_space<vmem>>, %arg5: memref<4x8x128xf32, #tpu.memory_space<vmem>>, %arg6: memref<2x8x128xf32, #tpu.memory_space<vmem>>, %arg7: memref<2x8x128xf32, #tpu.memory_space<vmem>>) attributes {dimension_semantics = [#tpu.dimension_semantics<parallel>, #tpu.dimension_semantics<parallel>], iteration_bounds = array<i64: 1, 1>, scalar_prefetch = 0 : i64, scratch_operands = 0 : i64, tpu.core_type = #tpu.core_type<tc>, window_params = [{transform_indices = @transform_0, window_bounds = array<i64: 4, 2, 128>}, {transform_indices = @transform_1, window_bounds = array<i64: 4, 2, 128>}, {transform_indices = @transform_2, window_bounds = array<i64: 4, 8, 128>}, {transform_indices = @transform_3, window_bounds = array<i64: 4, 8, 128>}, {transform_indices = @transform_4, window_bounds = array<i64: 2, 8, 128>}, {transform_indices = @transform_5, window_bounds = array<i64: 2, 8, 128>}]} {
    %cst = arith.constant 0.000000e+00 : f32
    %0 = vector.broadcast %cst : f32 to vector<2x8x128xf32>
    %c0_i32 = arith.constant 0 : i32
    %1 = arith.index_cast %c0_i32 : i32 to index
    %c0 = arith.constant 0 : index
    %c0_0 = arith.constant 0 : index
    %2 = vector.load %arg2[%1, %c0, %c0_0] : memref<4x2x128xf32, #tpu.memory_space<vmem>>, vector<1x2x128xf32>
    %3 = vector.shape_cast %2 : vector<1x2x128xf32> to vector<2x128xf32>
    %4 = vector.shape_cast %3 : vector<2x128xf32> to vector<2x1x128xf32>
    %5 = arith.index_cast %c0_i32 : i32 to index
    %c0_1 = arith.constant 0 : index
    %c0_2 = arith.constant 0 : index
    %6 = vector.load %arg3[%5, %c0_1, %c0_2] : memref<4x2x128xf32, #tpu.memory_space<vmem>>, vector<1x2x128xf32>
    %7 = vector.shape_cast %6 : vector<1x2x128xf32> to vector<2x128xf32>
    %8 = vector.shape_cast %7 : vector<2x128xf32> to vector<2x1x128xf32>
    %9 = arith.index_cast %c0_i32 : i32 to index
    %c0_3 = arith.constant 0 : index
    %c0_4 = arith.constant 0 : index
    %10 = vector.load %arg4[%9, %c0_3, %c0_4] : memref<4x8x128xf32, #tpu.memory_space<vmem>>, vector<1x8x128xf32>
    %11 = vector.shape_cast %10 : vector<1x8x128xf32> to vector<8x128xf32>
    %12 = vector.shape_cast %11 : vector<8x128xf32> to vector<1x8x128xf32>
    %13 = arith.index_cast %c0_i32 : i32 to index
    %c0_5 = arith.constant 0 : index
    %c0_6 = arith.constant 0 : index
    %14 = vector.load %arg5[%13, %c0_5, %c0_6] : memref<4x8x128xf32, #tpu.memory_space<vmem>>, vector<1x8x128xf32>
    %15 = vector.shape_cast %14 : vector<1x8x128xf32> to vector<8x128xf32>
    %16 = vector.shape_cast %15 : vector<8x128xf32> to vector<1x8x128xf32>
    %17 = vector.broadcast %4 : vector<2x1x128xf32> to vector<2x8x128xf32>
    %18 = vector.broadcast %12 : vector<1x8x128xf32> to vector<2x8x128xf32>
    %19 = arith.mulf %17, %18 : vector<2x8x128xf32>
    %20 = vector.broadcast %8 : vector<2x1x128xf32> to vector<2x8x128xf32>
    %21 = vector.broadcast %16 : vector<1x8x128xf32> to vector<2x8x128xf32>
    %22 = arith.mulf %20, %21 : vector<2x8x128xf32>
    %23 = arith.subf %19, %22 : vector<2x8x128xf32>
    %24 = arith.addf %0, %23 : vector<2x8x128xf32>
    %25 = vector.broadcast %4 : vector<2x1x128xf32> to vector<2x8x128xf32>
    %26 = vector.broadcast %16 : vector<1x8x128xf32> to vector<2x8x128xf32>
    %27 = arith.mulf %25, %26 : vector<2x8x128xf32>
    %28 = vector.broadcast %8 : vector<2x1x128xf32> to vector<2x8x128xf32>
    %29 = vector.broadcast %12 : vector<1x8x128xf32> to vector<2x8x128xf32>
    %30 = arith.mulf %28, %29 : vector<2x8x128xf32>
    %31 = arith.addf %27, %30 : vector<2x8x128xf32>
    %32 = arith.addf %0, %31 : vector<2x8x128xf32>
    %c1_i32 = arith.constant 1 : i32
    %33 = arith.index_cast %c1_i32 : i32 to index
    %c0_7 = arith.constant 0 : index
    %c0_8 = arith.constant 0 : index
    %34 = vector.load %arg2[%33, %c0_7, %c0_8] : memref<4x2x128xf32, #tpu.memory_space<vmem>>, vector<1x2x128xf32>
    %35 = vector.shape_cast %34 : vector<1x2x128xf32> to vector<2x128xf32>
    %36 = vector.shape_cast %35 : vector<2x128xf32> to vector<2x1x128xf32>
    %37 = arith.index_cast %c1_i32 : i32 to index
    %c0_9 = arith.constant 0 : index
    %c0_10 = arith.constant 0 : index
    %38 = vector.load %arg3[%37, %c0_9, %c0_10] : memref<4x2x128xf32, #tpu.memory_space<vmem>>, vector<1x2x128xf32>
    %39 = vector.shape_cast %38 : vector<1x2x128xf32> to vector<2x128xf32>
    %40 = vector.shape_cast %39 : vector<2x128xf32> to vector<2x1x128xf32>
    %41 = arith.index_cast %c1_i32 : i32 to index
    %c0_11 = arith.constant 0 : index
    %c0_12 = arith.constant 0 : index
    %42 = vector.load %arg4[%41, %c0_11, %c0_12] : memref<4x8x128xf32, #tpu.memory_space<vmem>>, vector<1x8x128xf32>
    %43 = vector.shape_cast %42 : vector<1x8x128xf32> to vector<8x128xf32>
    %44 = vector.shape_cast %43 : vector<8x128xf32> to vector<1x8x128xf32>
    %45 = arith.index_cast %c1_i32 : i32 to index
    %c0_13 = arith.constant 0 : index
    %c0_14 = arith.constant 0 : index
    %46 = vector.load %arg5[%45, %c0_13, %c0_14] : memref<4x8x128xf32, #tpu.memory_space<vmem>>, vector<1x8x128xf32>
    %47 = vector.shape_cast %46 : vector<1x8x128xf32> to vector<8x128xf32>
    %48 = vector.shape_cast %47 : vector<8x128xf32> to vector<1x8x128xf32>
    %49 = vector.broadcast %36 : vector<2x1x128xf32> to vector<2x8x128xf32>
    %50 = vector.broadcast %44 : vector<1x8x128xf32> to vector<2x8x128xf32>
    %51 = arith.mulf %49, %50 : vector<2x8x128xf32>
    %52 = vector.broadcast %40 : vector<2x1x128xf32> to vector<2x8x128xf32>
    %53 = vector.broadcast %48 : vector<1x8x128xf32> to vector<2x8x128xf32>
    %54 = arith.mulf %52, %53 : vector<2x8x128xf32>
    %55 = arith.subf %51, %54 : vector<2x8x128xf32>
    %56 = arith.addf %24, %55 : vector<2x8x128xf32>
    %57 = vector.broadcast %36 : vector<2x1x128xf32> to vector<2x8x128xf32>
    %58 = vector.broadcast %48 : vector<1x8x128xf32> to vector<2x8x128xf32>
    %59 = arith.mulf %57, %58 : vector<2x8x128xf32>
    %60 = vector.broadcast %40 : vector<2x1x128xf32> to vector<2x8x128xf32>
    %61 = vector.broadcast %44 : vector<1x8x128xf32> to vector<2x8x128xf32>
    %62 = arith.mulf %60, %61 : vector<2x8x128xf32>
    %63 = arith.addf %59, %62 : vector<2x8x128xf32>
    %64 = arith.addf %32, %63 : vector<2x8x128xf32>
    %c2_i32 = arith.constant 2 : i32
    %65 = arith.index_cast %c2_i32 : i32 to index
    %c0_15 = arith.constant 0 : index
    %c0_16 = arith.constant 0 : index
    %66 = vector.load %arg2[%65, %c0_15, %c0_16] : memref<4x2x128xf32, #tpu.memory_space<vmem>>, vector<1x2x128xf32>
    %67 = vector.shape_cast %66 : vector<1x2x128xf32> to vector<2x128xf32>
    %68 = vector.shape_cast %67 : vector<2x128xf32> to vector<2x1x128xf32>
    %69 = arith.index_cast %c2_i32 : i32 to index
    %c0_17 = arith.constant 0 : index
    %c0_18 = arith.constant 0 : index
    %70 = vector.load %arg3[%69, %c0_17, %c0_18] : memref<4x2x128xf32, #tpu.memory_space<vmem>>, vector<1x2x128xf32>
    %71 = vector.shape_cast %70 : vector<1x2x128xf32> to vector<2x128xf32>
    %72 = vector.shape_cast %71 : vector<2x128xf32> to vector<2x1x128xf32>
    %73 = arith.index_cast %c2_i32 : i32 to index
    %c0_19 = arith.constant 0 : index
    %c0_20 = arith.constant 0 : index
    %74 = vector.load %arg4[%73, %c0_19, %c0_20] : memref<4x8x128xf32, #tpu.memory_space<vmem>>, vector<1x8x128xf32>
    %75 = vector.shape_cast %74 : vector<1x8x128xf32> to vector<8x128xf32>
    %76 = vector.shape_cast %75 : vector<8x128xf32> to vector<1x8x128xf32>
    %77 = arith.index_cast %c2_i32 : i32 to index
    %c0_21 = arith.constant 0 : index
    %c0_22 = arith.constant 0 : index
    %78 = vector.load %arg5[%77, %c0_21, %c0_22] : memref<4x8x128xf32, #tpu.memory_space<vmem>>, vector<1x8x128xf32>
    %79 = vector.shape_cast %78 : vector<1x8x128xf32> to vector<8x128xf32>
    %80 = vector.shape_cast %79 : vector<8x128xf32> to vector<1x8x128xf32>
    %81 = vector.broadcast %68 : vector<2x1x128xf32> to vector<2x8x128xf32>
    %82 = vector.broadcast %76 : vector<1x8x128xf32> to vector<2x8x128xf32>
    %83 = arith.mulf %81, %82 : vector<2x8x128xf32>
    %84 = vector.broadcast %72 : vector<2x1x128xf32> to vector<2x8x128xf32>
    %85 = vector.broadcast %80 : vector<1x8x128xf32> to vector<2x8x128xf32>
    %86 = arith.mulf %84, %85 : vector<2x8x128xf32>
    %87 = arith.subf %83, %86 : vector<2x8x128xf32>
    %88 = arith.addf %56, %87 : vector<2x8x128xf32>
    %89 = vector.broadcast %68 : vector<2x1x128xf32> to vector<2x8x128xf32>
    %90 = vector.broadcast %80 : vector<1x8x128xf32> to vector<2x8x128xf32>
    %91 = arith.mulf %89, %90 : vector<2x8x128xf32>
    %92 = vector.broadcast %72 : vector<2x1x128xf32> to vector<2x8x128xf32>
    %93 = vector.broadcast %76 : vector<1x8x128xf32> to vector<2x8x128xf32>
    %94 = arith.mulf %92, %93 : vector<2x8x128xf32>
    %95 = arith.addf %91, %94 : vector<2x8x128xf32>
    %96 = arith.addf %64, %95 : vector<2x8x128xf32>
    %c3_i32 = arith.constant 3 : i32
    %97 = arith.index_cast %c3_i32 : i32 to index
    %c0_23 = arith.constant 0 : index
    %c0_24 = arith.constant 0 : index
    %98 = vector.load %arg2[%97, %c0_23, %c0_24] : memref<4x2x128xf32, #tpu.memory_space<vmem>>, vector<1x2x128xf32>
    %99 = vector.shape_cast %98 : vector<1x2x128xf32> to vector<2x128xf32>
    %100 = vector.shape_cast %99 : vector<2x128xf32> to vector<2x1x128xf32>
    %101 = arith.index_cast %c3_i32 : i32 to index
    %c0_25 = arith.constant 0 : index
    %c0_26 = arith.constant 0 : index
    %102 = vector.load %arg3[%101, %c0_25, %c0_26] : memref<4x2x128xf32, #tpu.memory_space<vmem>>, vector<1x2x128xf32>
    %103 = vector.shape_cast %102 : vector<1x2x128xf32> to vector<2x128xf32>
    %104 = vector.shape_cast %103 : vector<2x128xf32> to vector<2x1x128xf32>
    %105 = arith.index_cast %c3_i32 : i32 to index
    %c0_27 = arith.constant 0 : index
    %c0_28 = arith.constant 0 : index
    %106 = vector.load %arg4[%105, %c0_27, %c0_28] : memref<4x8x128xf32, #tpu.memory_space<vmem>>, vector<1x8x128xf32>
    %107 = vector.shape_cast %106 : vector<1x8x128xf32> to vector<8x128xf32>
    %108 = vector.shape_cast %107 : vector<8x128xf32> to vector<1x8x128xf32>
    %109 = arith.index_cast %c3_i32 : i32 to index
    %c0_29 = arith.constant 0 : index
    %c0_30 = arith.constant 0 : index
    %110 = vector.load %arg5[%109, %c0_29, %c0_30] : memref<4x8x128xf32, #tpu.memory_space<vmem>>, vector<1x8x128xf32>
    %111 = vector.shape_cast %110 : vector<1x8x128xf32> to vector<8x128xf32>
    %112 = vector.shape_cast %111 : vector<8x128xf32> to vector<1x8x128xf32>
    %113 = vector.broadcast %100 : vector<2x1x128xf32> to vector<2x8x128xf32>
    %114 = vector.broadcast %108 : vector<1x8x128xf32> to vector<2x8x128xf32>
    %115 = arith.mulf %113, %114 : vector<2x8x128xf32>
    %116 = vector.broadcast %104 : vector<2x1x128xf32> to vector<2x8x128xf32>
    %117 = vector.broadcast %112 : vector<1x8x128xf32> to vector<2x8x128xf32>
    %118 = arith.mulf %116, %117 : vector<2x8x128xf32>
    %119 = arith.subf %115, %118 : vector<2x8x128xf32>
    %120 = arith.addf %88, %119 : vector<2x8x128xf32>
    %121 = vector.broadcast %100 : vector<2x1x128xf32> to vector<2x8x128xf32>
    %122 = vector.broadcast %112 : vector<1x8x128xf32> to vector<2x8x128xf32>
    %123 = arith.mulf %121, %122 : vector<2x8x128xf32>
    %124 = vector.broadcast %104 : vector<2x1x128xf32> to vector<2x8x128xf32>
    %125 = vector.broadcast %108 : vector<1x8x128xf32> to vector<2x8x128xf32>
    %126 = arith.mulf %124, %125 : vector<2x8x128xf32>
    %127 = arith.addf %123, %126 : vector<2x8x128xf32>
    %128 = arith.addf %96, %127 : vector<2x8x128xf32>
    %c4_i32 = arith.constant 4 : i32
    %c0_31 = arith.constant 0 : index
    %c0_32 = arith.constant 0 : index
    %c0_33 = arith.constant 0 : index
    %129 = vector.load %arg6[%c0_31, %c0_32, %c0_33] : memref<2x8x128xf32, #tpu.memory_space<vmem>>, vector<2x8x128xf32>
    tpu.vector_store %arg6[%c0_31, %c0_32, %c0_33], %120 {strides = array<i32>} : memref<2x8x128xf32, #tpu.memory_space<vmem>>, vector<2x8x128xf32>,
    %c0_34 = arith.constant 0 : index
    %c0_35 = arith.constant 0 : index
    %c0_36 = arith.constant 0 : index
    %130 = vector.load %arg7[%c0_34, %c0_35, %c0_36] : memref<2x8x128xf32, #tpu.memory_space<vmem>>, vector<2x8x128xf32>
    tpu.vector_store %arg7[%c0_34, %c0_35, %c0_36], %128 {strides = array<i32>} : memref<2x8x128xf32, #tpu.memory_space<vmem>>, vector<2x8x128xf32>,
    return
  }
  func.func @transform_0(%arg0: i32, %arg1: i32) -> (i32, i32, i32) {
    %c0_i32 = arith.constant 0 : i32
    %c0_i32_0 = arith.constant 0 : i32
    %c0_i32_1 = arith.constant 0 : i32
    return %c0_i32, %c0_i32_0, %arg0 : i32, i32, i32
  }
  func.func @transform_1(%arg0: i32, %arg1: i32) -> (i32, i32, i32) {
    %c0_i32 = arith.constant 0 : i32
    %c0_i32_0 = arith.constant 0 : i32
    %c0_i32_1 = arith.constant 0 : i32
    return %c0_i32, %c0_i32_0, %arg0 : i32, i32, i32
  }
  func.func @transform_2(%arg0: i32, %arg1: i32) -> (i32, i32, i32) {
    %c0_i32 = arith.constant 0 : i32
    %c0_i32_0 = arith.constant 0 : i32
    return %c0_i32, %arg1, %arg0 : i32, i32, i32
  }
  func.func @transform_3(%arg0: i32, %arg1: i32) -> (i32, i32, i32) {
    %c0_i32 = arith.constant 0 : i32
    %c0_i32_0 = arith.constant 0 : i32
    return %c0_i32, %arg1, %arg0 : i32, i32, i32
  }
  func.func @transform_4(%arg0: i32, %arg1: i32) -> (i32, i32, i32) {
    %c0_i32 = arith.constant 0 : i32
    %c0_i32_0 = arith.constant 0 : i32
    return %c0_i32, %arg1, %arg0 : i32, i32, i32
  }
  func.func @transform_5(%arg0: i32, %arg1: i32) -> (i32, i32, i32) {
    %c0_i32 = arith.constant 0 : i32
    %c0_i32_0 = arith.constant 0 : i32
    return %c0_i32, %arg1, %arg0 : i32, i32, i32
  }
}

</mosaic_0001>

<llo_original>
// kernel: tpu_custom_call.1
$region0: #{tpu_custom_call.1}
  #allocation0 [shape = 'u32[]', space=smem, size = 0x4, offset = 0x4, fixed_abs, tag = 'smem constant byte address 0x4 - core index']
  #allocation1 [shape = 'u32[144,128]{1,0:T(1,128)}', space=vmem, size = 0x12000, scoped, tag = 'internal scratch']
  %s0 = inlined_call_operand.hbm [shape: f32[4,2,128], index: 0, kind: input, shape index: {}]
  %s1 = inlined_call_operand.hbm [shape: f32[4,2,128], index: 1, kind: input, shape index: {}]
  %s2 = inlined_call_operand.hbm [shape: f32[4,8,128], index: 2, kind: input, shape index: {}]
  %s3 = inlined_call_operand.hbm [shape: f32[4,8,128], index: 3, kind: input, shape index: {}]
  %s4 = inlined_call_operand.hbm [shape: f32[2,8,128], index: 4, kind: output, shape index: {0}]
  %s5 = inlined_call_operand.hbm [shape: f32[2,8,128], index: 5, kind: output, shape index: {1}]
  %6 = xla_tuple %s4, %s5
  %s7 = sld [smem:[#allocation0]]
  $region50: #{tpu_custom_call.1} parent=0
    _
  %s9 = ssub.s32 1, %s7
  %s10 = scalar_select 0, %s9, %s7
  $region1: #{tpu_custom_call.1} parent=0
    #allocation2 [shape = 'u8[4096]{0}', space=vmem, size = 0x1000, scoped, tag = 'input window, operand 0, single buffered']
    #allocation3 [shape = 's32[1]{0}', space=sflag, size = 0x4, scoped, tag = 'scoped memory for tpu_custom_call.1']
    #allocation4 [shape = 's32[1]{0}', space=sflag, size = 0x4, scoped, tag = 'scoped memory for tpu_custom_call.1']
    #allocation5 [shape = 'u8[4096]{0}', space=vmem, size = 0x1000, scoped, tag = 'input window, operand 1, single buffered']
    #allocation6 [shape = 's32[1]{0}', space=sflag, size = 0x4, scoped, tag = 'scoped memory for tpu_custom_call.1']
    #allocation7 [shape = 'u8[16384]{0}', space=vmem, size = 0x4000, scoped, tag = 'input window, operand 2, single buffered']
    #allocation8 [shape = 'u8[16384]{0}', space=vmem, size = 0x4000, scoped, tag = 'input window, operand 3, single buffered']
    #allocation9 [shape = 's32[1]{0}', space=sflag, size = 0x4, scoped, tag = 'scoped memory for tpu_custom_call.1']
    #allocation10 [shape = 'u8[8192]{0}', space=vmem, size = 0x2000, scoped, tag = 'output window, operand 0, single buffered']
    #allocation11 [shape = 'u8[8192]{0}', space=vmem, size = 0x2000, scoped, tag = 'output window, operand 1, single buffered']
    #allocation12 [shape = 's32[1]{0}', space=sflag, size = 0x4, scoped, tag = 'scoped memory for tpu_custom_call.1']
    %11 = vsyncpa [#allocation3], 0
    %12 = vsyncpa [#allocation6], 0
    %13 = vsyncpa [#allocation9], 0
    %14 = vsyncpa [#allocation4], 0
    %15 = vsyncpa [#allocation12], 0
    // Predicated region
    $region2: #{tpu_custom_call.1} parent=1 // pred_check
      _
    $region3: #{tpu_custom_call.1} parent=1 // pred_check_branch
      %17 = sbr.rel (0) target = $region5
    $region4: #{tpu_custom_call.1} parent=1 // pred_region
      %s19 = ssub.s32 128, 128
      %20 = vsyncadd [#allocation3], %s19
      %s21 = sshll.u32 [#allocation2], 4
      %s22 = int_to_ptr.vmem [resolvable:$true] %s21
      %27 = dma.hbm_to_vmem [thread:$0]  %s0, 128, %s22, [#allocation3], 32, 32, 2
    $region5: #{tpu_custom_call.1} parent=1 // pred_fallthru
      _
    // Predicated region
    $region6: #{tpu_custom_call.1} parent=1 // pred_check
      _
    $region7: #{tpu_custom_call.1} parent=1 // pred_check_branch
      %29 = sbr.rel (0) target = $region9
    $region8: #{tpu_custom_call.1} parent=1 // pred_region
      %s31 = ssub.s32 128, 128
      %32 = vsyncadd [#allocation6], %s31
      %s33 = sshll.u32 [#allocation5], 4
      %s34 = int_to_ptr.vmem [resolvable:$true] %s33
      %39 = dma.hbm_to_vmem [thread:$0]  %s1, 128, %s34, [#allocation6], 32, 32, 2
    $region9: #{tpu_custom_call.1} parent=1 // pred_fallthru
      _
    // Predicated region
    $region10: #{tpu_custom_call.1} parent=1 // pred_check
      _
    $region11: #{tpu_custom_call.1} parent=1 // pred_check_branch
      %41 = sbr.rel (0) target = $region13
    $region12: #{tpu_custom_call.1} parent=1 // pred_region
      %s43 = ssub.s32 512, 512
      %44 = vsyncadd [#allocation6], %s43
      %s45 = sshll.u32 [#allocation7], 4
      %s46 = int_to_ptr.vmem [resolvable:$true] %s45
      %51 = dma.hbm_to_vmem [thread:$0]  %s2, 512, %s46, [#allocation6], 128, 128, 8
    $region13: #{tpu_custom_call.1} parent=1 // pred_fallthru
      _
    // Predicated region
    $region14: #{tpu_custom_call.1} parent=1 // pred_check
      _
    $region15: #{tpu_custom_call.1} parent=1 // pred_check_branch
      %53 = sbr.rel (0) target = $region17
    $region16: #{tpu_custom_call.1} parent=1 // pred_region
      %s55 = ssub.s32 512, 512
      %56 = vsyncadd [#allocation9], %s55
      %s57 = sshll.u32 [#allocation8], 4
      %s58 = int_to_ptr.vmem [resolvable:$true] %s57
      %63 = dma.hbm_to_vmem [thread:$0]  %s3, 512, %s58, [#allocation9], 128, 128, 8
    $region17: #{tpu_custom_call.1} parent=1 // pred_fallthru
      _
    // Predicated region
    $region18: #{tpu_custom_call.1} parent=1 // pred_check
      _
    $region19: #{tpu_custom_call.1} parent=1 // pred_check_branch
      %65 = sbr.rel (0) target = $region21
    $region20: #{tpu_custom_call.1} parent=1 // pred_region
      %66 = dma.done [#allocation3], 128
    $region21: #{tpu_custom_call.1} parent=1 // pred_fallthru
      _
    // Predicated region
    $region22: #{tpu_custom_call.1} parent=1 // pred_check
      _
    $region23: #{tpu_custom_call.1} parent=1 // pred_check_branch
      %68 = sbr.rel (0) target = $region25
    $region24: #{tpu_custom_call.1} parent=1 // pred_region
      %69 = dma.done [#allocation6], 128
    $region25: #{tpu_custom_call.1} parent=1 // pred_fallthru
      _
    // Predicated region
    $region26: #{tpu_custom_call.1} parent=1 // pred_check
      _
    $region27: #{tpu_custom_call.1} parent=1 // pred_check_branch
      %71 = sbr.rel (0) target = $region29
    $region28: #{tpu_custom_call.1} parent=1 // pred_region
      %72 = dma.done [#allocation6], 512
    $region29: #{tpu_custom_call.1} parent=1 // pred_fallthru
      _
    // Predicated region
    $region30: #{tpu_custom_call.1} parent=1 // pred_check
      _
    $region31: #{tpu_custom_call.1} parent=1 // pred_check_branch
      %74 = sbr.rel (0) target = $region33
    $region32: #{tpu_custom_call.1} parent=1 // pred_region
      %75 = dma.done [#allocation9], 512
    $region33: #{tpu_custom_call.1} parent=1 // pred_fallthru
      _
    %v76 = vld [vmem:[#allocation2] sm:$0x3]
    %v79 = vunpack.c.l.s4 1966171168
    %v80 = vunpack.c.0.s8 %v79
    %v81 = vlaneseq
    %v82 = vshrl.u32 %v81, 7
    %v83 = vsub.s32 %v80, %v82
    %v84 = vrot.slane %v76, %v83
    %v85 = vcombine.high %v84, %v84
    %v87 = vunpack.c.l.s4 1966171168
    %v88 = vunpack.c.0.s8 %v87
    %v89 = vlaneseq
    %v90 = vshrl.u32 %v89, 7
    %v91 = vsub.s32 %v88, %v90
    %v92 = vrot.slane %v84, %v91
    %v94 = vunpack.c.l.s4 1966171168
    %v95 = vunpack.c.0.s8 %v94
    %v96 = vlaneseq
    %v97 = vshrl.u32 %v96, 7
    %v98 = vsub.s32 %v95, %v97
    %v99 = vrot.slane %v85, %v98
    %v100 = vld [vmem:[#allocation5] sm:$0x3]
    %v103 = vunpack.c.l.s4 1966171168
    %v104 = vunpack.c.0.s8 %v103
    %v105 = vlaneseq
    %v106 = vshrl.u32 %v105, 7
    %v107 = vsub.s32 %v104, %v106
    %v108 = vrot.slane %v100, %v107
    %v109 = vcombine.high %v108, %v108
    %v111 = vunpack.c.l.s4 1966171168
    %v112 = vunpack.c.0.s8 %v111
    %v113 = vlaneseq
    %v114 = vshrl.u32 %v113, 7
    %v115 = vsub.s32 %v112, %v114
    %v116 = vrot.slane %v108, %v115
    %v118 = vunpack.c.l.s4 1966171168
    %v119 = vunpack.c.0.s8 %v118
    %v120 = vlaneseq
    %v121 = vshrl.u32 %v120, 7
    %v122 = vsub.s32 %v119, %v121
    %v123 = vrot.slane %v109, %v122
    %v124 = vld [vmem:[#allocation7] sm:$0xff]
    %v125 = vld [vmem:[#allocation8] sm:$0xff]
    %v126 = vlaneseq
    %v127 = vshrl.u32 %v126, 7
    %v128 = vsub.s32 0, %v127
    %v129 = vrot.slane %v92, %v128
    %v130 = vlaneseq
    %v131 = vshrl.u32 %v130, 7
    %v132 = vsub.s32 0, %v131
    %v133 = vrot.slane %v99, %v132
    %v136 = vmul.f32 %v129, %v124
    %v137 = vmul.f32 %v133, %v124
    %v138 = vlaneseq
    %v139 = vshrl.u32 %v138, 7
    %v140 = vsub.s32 0, %v139
    %v141 = vrot.slane %v116, %v140
    %v142 = vlaneseq
    %v143 = vshrl.u32 %v142, 7
    %v144 = vsub.s32 0, %v143
    %v145 = vrot.slane %v123, %v144
    %v148 = vmul.f32 %v141, %v125
    %v149 = vmul.f32 %v145, %v125
    %v150 = vsub.f32 %v136, %v148
    %v151 = vsub.f32 %v137, %v149
    %v152 = vadd.f32 %v150, 0.0
    %v153 = vadd.f32 %v151, 0.0
    %v154 = vmul.f32 %v129, %v125
    %v155 = vmul.f32 %v133, %v125
    %v156 = vmul.f32 %v141, %v124
    %v157 = vmul.f32 %v145, %v124
    %v158 = vadd.f32 %v154, %v156
    %v159 = vadd.f32 %v155, %v157
    %v160 = vadd.f32 %v158, 0.0
    %v161 = vadd.f32 %v159, 0.0
    %s162 = scalar_lea.vmem [#allocation2], 2
    %v163 = vld [vmem:[%s162] sm:$0x3]
    %v166 = vunpack.c.l.s4 1966171168
    %v167 = vunpack.c.0.s8 %v166
    %v168 = vlaneseq
    %v169 = vshrl.u32 %v168, 7
    %v170 = vsub.s32 %v167, %v169
    %v171 = vrot.slane %v163, %v170
    %v172 = vcombine.high %v171, %v171
    %v174 = vunpack.c.l.s4 1966171168
    %v175 = vunpack.c.0.s8 %v174
    %v176 = vlaneseq
    %v177 = vshrl.u32 %v176, 7
    %v178 = vsub.s32 %v175, %v177
    %v179 = vrot.slane %v171, %v178
    %v181 = vunpack.c.l.s4 1966171168
    %v182 = vunpack.c.0.s8 %v181
    %v183 = vlaneseq
    %v184 = vshrl.u32 %v183, 7
    %v185 = vsub.s32 %v182, %v184
    %v186 = vrot.slane %v172, %v185
    %s187 = scalar_lea.vmem [#allocation5], 2
    %v188 = vld [vmem:[%s187] sm:$0x3]
    %v191 = vunpack.c.l.s4 1966171168
    %v192 = vunpack.c.0.s8 %v191
    %v193 = vlaneseq
    %v194 = vshrl.u32 %v193, 7
    %v195 = vsub.s32 %v192, %v194
    %v196 = vrot.slane %v188, %v195
    %v197 = vcombine.high %v196, %v196
    %v199 = vunpack.c.l.s4 1966171168
    %v200 = vunpack.c.0.s8 %v199
    %v201 = vlaneseq
    %v202 = vshrl.u32 %v201, 7
    %v203 = vsub.s32 %v200, %v202
    %v204 = vrot.slane %v196, %v203
    %v206 = vunpack.c.l.s4 1966171168
    %v207 = vunpack.c.0.s8 %v206
    %v208 = vlaneseq
    %v209 = vshrl.u32 %v208, 7
    %v210 = vsub.s32 %v207, %v209
    %v211 = vrot.slane %v197, %v210
    %s212 = scalar_lea.vmem [#allocation7], 8
    %v213 = vld [vmem:[%s212] sm:$0xff]
    %s214 = scalar_lea.vmem [#allocation8], 8
    %v215 = vld [vmem:[%s214] sm:$0xff]
    %v216 = vlaneseq
    %v217 = vshrl.u32 %v216, 7
    %v218 = vsub.s32 0, %v217
    %v219 = vrot.slane %v179, %v218
    %v220 = vlaneseq
    %v221 = vshrl.u32 %v220, 7
    %v222 = vsub.s32 0, %v221
    %v223 = vrot.slane %v186, %v222
    %v226 = vmul.f32 %v219, %v213
    %v227 = vmul.f32 %v223, %v213
    %v228 = vlaneseq
    %v229 = vshrl.u32 %v228, 7
    %v230 = vsub.s32 0, %v229
    %v231 = vrot.slane %v204, %v230
    %v232 = vlaneseq
    %v233 = vshrl.u32 %v232, 7
    %v234 = vsub.s32 0, %v233
    %v235 = vrot.slane %v211, %v234
    %v238 = vmul.f32 %v231, %v215
    %v239 = vmul.f32 %v235, %v215
    %v240 = vsub.f32 %v226, %v238
    %v241 = vsub.f32 %v227, %v239
    %v242 = vadd.f32 %v152, %v240
    %v243 = vadd.f32 %v153, %v241
    %v244 = vmul.f32 %v219, %v215
    %v245 = vmul.f32 %v223, %v215
    %v246 = vmul.f32 %v231, %v213
    %v247 = vmul.f32 %v235, %v213
    %v248 = vadd.f32 %v244, %v246
    %v249 = vadd.f32 %v245, %v247
    %v250 = vadd.f32 %v160, %v248
    %v251 = vadd.f32 %v161, %v249
    %s252 = scalar_lea.vmem [#allocation2], 4
    %v253 = vld [vmem:[%s252] sm:$0x3]
    %v256 = vunpack.c.l.s4 1966171168
    %v257 = vunpack.c.0.s8 %v256
    %v258 = vlaneseq
    %v259 = vshrl.u32 %v258, 7
    %v260 = vsub.s32 %v257, %v259
    %v261 = vrot.slane %v253, %v260
    %v262 = vcombine.high %v261, %v261
    %v264 = vunpack.c.l.s4 1966171168
    %v265 = vunpack.c.0.s8 %v264
    %v266 = vlaneseq
    %v267 = vshrl.u32 %v266, 7
    %v268 = vsub.s32 %v265, %v267
    %v269 = vrot.slane %v261, %v268
    %v271 = vunpack.c.l.s4 1966171168
    %v272 = vunpack.c.0.s8 %v271
    %v273 = vlaneseq
    %v274 = vshrl.u32 %v273, 7
    %v275 = vsub.s32 %v272, %v274
    %v276 = vrot.slane %v262, %v275
    %s277 = scalar_lea.vmem [#allocation5], 4
    %v278 = vld [vmem:[%s277] sm:$0x3]
    %v281 = vunpack.c.l.s4 1966171168
    %v282 = vunpack.c.0.s8 %v281
    %v283 = vlaneseq
    %v284 = vshrl.u32 %v283, 7
    %v285 = vsub.s32 %v282, %v284
    %v286 = vrot.slane %v278, %v285
    %v287 = vcombine.high %v286, %v286
    %v289 = vunpack.c.l.s4 1966171168
    %v290 = vunpack.c.0.s8 %v289
    %v291 = vlaneseq
    %v292 = vshrl.u32 %v291, 7
    %v293 = vsub.s32 %v290, %v292
    %v294 = vrot.slane %v286, %v293
    %v296 = vunpack.c.l.s4 1966171168
    %v297 = vunpack.c.0.s8 %v296
    %v298 = vlaneseq
    %v299 = vshrl.u32 %v298, 7
    %v300 = vsub.s32 %v297, %v299
    %v301 = vrot.slane %v287, %v300
    %s302 = scalar_lea.vmem [#allocation7], 16
    %v303 = vld [vmem:[%s302] sm:$0xff]
    %s304 = scalar_lea.vmem [#allocation8], 16
    %v305 = vld [vmem:[%s304] sm:$0xff]
    %v306 = vlaneseq
    %v307 = vshrl.u32 %v306, 7
    %v308 = vsub.s32 0, %v307
    %v309 = vrot.slane %v269, %v308
    %v310 = vlaneseq
    %v311 = vshrl.u32 %v310, 7
    %v312 = vsub.s32 0, %v311
    %v313 = vrot.slane %v276, %v312
    %v316 = vmul.f32 %v309, %v303
    %v317 = vmul.f32 %v313, %v303
    %v318 = vlaneseq
    %v319 = vshrl.u32 %v318, 7
    %v320 = vsub.s32 0, %v319
    %v321 = vrot.slane %v294, %v320
    %v322 = vlaneseq
    %v323 = vshrl.u32 %v322, 7
    %v324 = vsub.s32 0, %v323
    %v325 = vrot.slane %v301, %v324
    %v328 = vmul.f32 %v321, %v305
    %v329 = vmul.f32 %v325, %v305
    %v330 = vsub.f32 %v316, %v328
    %v331 = vsub.f32 %v317, %v329
    %v332 = vadd.f32 %v242, %v330
    %v333 = vadd.f32 %v243, %v331
    %v334 = vmul.f32 %v309, %v305
    %v335 = vmul.f32 %v313, %v305
    %v336 = vmul.f32 %v321, %v303
    %v337 = vmul.f32 %v325, %v303
    %v338 = vadd.f32 %v334, %v336
    %v339 = vadd.f32 %v335, %v337
    %v340 = vadd.f32 %v250, %v338
    %v341 = vadd.f32 %v251, %v339
    %s342 = scalar_lea.vmem [#allocation2], 6
    %v343 = vld [vmem:[%s342] sm:$0x3]
    %v346 = vunpack.c.l.s4 1966171168
    %v347 = vunpack.c.0.s8 %v346
    %v348 = vlaneseq
    %v349 = vshrl.u32 %v348, 7
    %v350 = vsub.s32 %v347, %v349
    %v351 = vrot.slane %v343, %v350
    %v352 = vcombine.high %v351, %v351
    %v354 = vunpack.c.l.s4 1966171168
    %v355 = vunpack.c.0.s8 %v354
    %v356 = vlaneseq
    %v357 = vshrl.u32 %v356, 7
    %v358 = vsub.s32 %v355, %v357
    %v359 = vrot.slane %v351, %v358
    %v361 = vunpack.c.l.s4 1966171168
    %v362 = vunpack.c.0.s8 %v361
    %v363 = vlaneseq
    %v364 = vshrl.u32 %v363, 7
    %v365 = vsub.s32 %v362, %v364
    %v366 = vrot.slane %v352, %v365
    %s367 = scalar_lea.vmem [#allocation5], 6
    %v368 = vld [vmem:[%s367] sm:$0x3]
    %v371 = vunpack.c.l.s4 1966171168
    %v372 = vunpack.c.0.s8 %v371
    %v373 = vlaneseq
    %v374 = vshrl.u32 %v373, 7
    %v375 = vsub.s32 %v372, %v374
    %v376 = vrot.slane %v368, %v375
    %v377 = vcombine.high %v376, %v376
    %v379 = vunpack.c.l.s4 1966171168
    %v380 = vunpack.c.0.s8 %v379
    %v381 = vlaneseq
    %v382 = vshrl.u32 %v381, 7
    %v383 = vsub.s32 %v380, %v382
    %v384 = vrot.slane %v376, %v383
    %v386 = vunpack.c.l.s4 1966171168
    %v387 = vunpack.c.0.s8 %v386
    %v388 = vlaneseq
    %v389 = vshrl.u32 %v388, 7
    %v390 = vsub.s32 %v387, %v389
    %v391 = vrot.slane %v377, %v390
    %s392 = scalar_lea.vmem [#allocation7], 24
    %v393 = vld [vmem:[%s392] sm:$0xff]
    %s394 = scalar_lea.vmem [#allocation8], 24
    %v395 = vld [vmem:[%s394] sm:$0xff]
    %v396 = vlaneseq
    %v397 = vshrl.u32 %v396, 7
    %v398 = vsub.s32 0, %v397
    %v399 = vrot.slane %v359, %v398
    %v400 = vlaneseq
    %v401 = vshrl.u32 %v400, 7
    %v402 = vsub.s32 0, %v401
    %v403 = vrot.slane %v366, %v402
    %v406 = vmul.f32 %v399, %v393
    %v407 = vmul.f32 %v403, %v393
    %v408 = vlaneseq
    %v409 = vshrl.u32 %v408, 7
    %v410 = vsub.s32 0, %v409
    %v411 = vrot.slane %v384, %v410
    %v412 = vlaneseq
    %v413 = vshrl.u32 %v412, 7
    %v414 = vsub.s32 0, %v413
    %v415 = vrot.slane %v391, %v414
    %v418 = vmul.f32 %v411, %v395
    %v419 = vmul.f32 %v415, %v395
    %v420 = vsub.f32 %v406, %v418
    %v421 = vsub.f32 %v407, %v419
    %v422 = vadd.f32 %v332, %v420
    %v423 = vadd.f32 %v333, %v421
    %v424 = vmul.f32 %v399, %v395
    %v425 = vmul.f32 %v403, %v395
    %v426 = vmul.f32 %v411, %v393
    %v427 = vmul.f32 %v415, %v393
    %v428 = vadd.f32 %v424, %v426
    %v429 = vadd.f32 %v425, %v427
    %v430 = vadd.f32 %v340, %v428
    %v431 = vadd.f32 %v341, %v429
    %432 = vst [vmem:[#allocation10] sm:$0xff] %v422
    %433 = vst [vmem:[#allocation10 + $0x8] sm:$0xff] %v423
    %434 = vst [vmem:[#allocation11] sm:$0xff] %v430
    %435 = vst [vmem:[#allocation11 + $0x8] sm:$0xff] %v431
    // Predicated region
    $region34: #{tpu_custom_call.1} parent=1 // pred_check
      _
    $region35: #{tpu_custom_call.1} parent=1 // pred_check_branch
      %437 = sbr.rel (0) target = $region37
    $region36: #{tpu_custom_call.1} parent=1 // pred_region
      %s439 = ssub.s32 256, 256
      %440 = vsyncadd [#allocation4], %s439
      %s441 = sshll.u32 [#allocation10], 4
      %s442 = int_to_ptr.vmem [resolvable:$true] %s441
      %447 = dma.vmem_to_hbm [thread:$0]  %s442, 256, %s4, [#allocation4], 128, 128, 8
    $region37: #{tpu_custom_call.1} parent=1 // pred_fallthru
      _
    // Predicated region
    $region38: #{tpu_custom_call.1} parent=1 // pred_check
      _
    $region39: #{tpu_custom_call.1} parent=1 // pred_check_branch
      %449 = sbr.rel (0) target = $region41
    $region40: #{tpu_custom_call.1} parent=1 // pred_region
      %s451 = ssub.s32 256, 256
      %452 = vsyncadd [#allocation12], %s451
      %s453 = sshll.u32 [#allocation11], 4
      %s454 = int_to_ptr.vmem [resolvable:$true] %s453
      %459 = dma.vmem_to_hbm [thread:$0]  %s454, 256, %s5, [#allocation12], 128, 128, 8
    $region41: #{tpu_custom_call.1} parent=1 // pred_fallthru
      _
    // Predicated region
    $region42: #{tpu_custom_call.1} parent=1 // pred_check
      _
    $region43: #{tpu_custom_call.1} parent=1 // pred_check_branch
      %461 = sbr.rel (0) target = $region45
    $region44: #{tpu_custom_call.1} parent=1 // pred_region
      %462 = dma.done [#allocation4], 256
    $region45: #{tpu_custom_call.1} parent=1 // pred_fallthru
      _
    // Predicated region
    $region46: #{tpu_custom_call.1} parent=1 // pred_check
      _
    $region47: #{tpu_custom_call.1} parent=1 // pred_check_branch
      %464 = sbr.rel (0) target = $region49
    $region48: #{tpu_custom_call.1} parent=1 // pred_region
      %465 = dma.done [#allocation12], 256
    $region49: #{tpu_custom_call.1} parent=1 // pred_fallthru
      _
    %466 = vsyncpa [#allocation3], 1
    %467 = vsyncpa [#allocation6], 1
    %468 = vsyncpa [#allocation9], 1
    %469 = vsyncpa [#allocation4], 1
    %470 = vsyncpa [#allocation12], 1

// kernel: tpu_custom_call.1
$region0: #{tpu_custom_call.1}
  #allocation0 [shape = 'u32[]', space=smem, size = 0x4, offset = 0x4, fixed_abs, tag = 'smem constant byte address 0x4 - core index']
  #allocation1 [shape = 'u32[144,128]{1,0:T(1,128)}', space=vmem, size = 0x12000, scoped, tag = 'internal scratch']
  %s0 = inlined_call_operand.hbm [shape: f32[4,2,128], index: 0, kind: input, shape index: {}]
  %s1 = inlined_call_operand.hbm [shape: f32[4,2,128], index: 1, kind: input, shape index: {}]
  %s2 = inlined_call_operand.hbm [shape: f32[4,8,128], index: 2, kind: input, shape index: {}]
  %s3 = inlined_call_operand.hbm [shape: f32[4,8,128], index: 3, kind: input, shape index: {}]
  %s4 = inlined_call_operand.hbm [shape: f32[2,8,128], index: 4, kind: output, shape index: {0}]
  %s5 = inlined_call_operand.hbm [shape: f32[2,8,128], index: 5, kind: output, shape index: {1}]
  %6 = xla_tuple %s4, %s5
  %s7 = sld [smem:[#allocation0]]
  $region50: #{tpu_custom_call.1} parent=0
    _
  %s9 = ssub.s32 1, %s7
  %s10 = scalar_select 0, %s9, %s7
  $region1: #{tpu_custom_call.1} parent=0
    #allocation2 [shape = 'u8[4096]{0}', space=vmem, size = 0x1000, scoped, tag = 'input window, operand 0, single buffered']
    #allocation3 [shape = 's32[1]{0}', space=sflag, size = 0x4, scoped, tag = 'scoped memory for tpu_custom_call.1']
    #allocation4 [shape = 's32[1]{0}', space=sflag, size = 0x4, scoped, tag = 'scoped memory for tpu_custom_call.1']
    #allocation5 [shape = 'u8[4096]{0}', space=vmem, size = 0x1000, scoped, tag = 'input window, operand 1, single buffered']
    #allocation6 [shape = 's32[1]{0}', space=sflag, size = 0x4, scoped, tag = 'scoped memory for tpu_custom_call.1']
    #allocation7 [shape = 'u8[16384]{0}', space=vmem, size = 0x4000, scoped, tag = 'input window, operand 2, single buffered']
    #allocation8 [shape = 'u8[16384]{0}', space=vmem, size = 0x4000, scoped, tag = 'input window, operand 3, single buffered']
    #allocation9 [shape = 's32[1]{0}', space=sflag, size = 0x4, scoped, tag = 'scoped memory for tpu_custom_call.1']
    #allocation10 [shape = 'u8[8192]{0}', space=vmem, size = 0x2000, scoped, tag = 'output window, operand 0, single buffered']
    #allocation11 [shape = 'u8[8192]{0}', space=vmem, size = 0x2000, scoped, tag = 'output window, operand 1, single buffered']
    #allocation12 [shape = 's32[1]{0}', space=sflag, size = 0x4, scoped, tag = 'scoped memory for tpu_custom_call.1']
    %11 = vsyncpa [#allocation3], 0
    %12 = vsyncpa [#allocation6], 0
    %13 = vsyncpa [#allocation9], 0
    %14 = vsyncpa [#allocation4], 0
    %15 = vsyncpa [#allocation12], 0
    // Predicated region
    $region2: #{tpu_custom_call.1} parent=1 // pred_check
      _
    $region3: #{tpu_custom_call.1} parent=1 // pred_check_branch
      %17 = sbr.rel (0) target = $region5
    $region4: #{tpu_custom_call.1} parent=1 // pred_region
      %s19 = ssub.s32 128, 128
      %20 = vsyncadd [#allocation3], %s19
      %s21 = sshll.u32 [#allocation2], 4
      %s22 = int_to_ptr.vmem [resolvable:$true] %s21
      %27 = dma.hbm_to_vmem [thread:$0]  %s0, 128, %s22, [#allocation3], 32, 32, 2
    $region5: #{tpu_custom_call.1} parent=1 // pred_fallthru
      _
    // Predicated region
    $region6: #{tpu_custom_call.1} parent=1 // pred_check
      _
    $region7: #{tpu_custom_call.1} parent=1 // pred_check_branch
      %29 = sbr.rel (0) target = $region9
    $region8: #{tpu_custom_call.1} parent=1 // pred_region
      %s31 = ssub.s32 128, 128
      %32 = vsyncadd [#allocation6], %s31
      %s33 = sshll.u32 [#allocation5], 4
      %s34 = int_to_ptr.vmem [resolvable:$true] %s33
      %39 = dma.hbm_to_vmem [thread:$0]  %s1, 128, %s34, [#allocation6], 32, 32, 2
    $region9: #{tpu_custom_call.1} parent=1 // pred_fallthru
      _
    // Predicated region
    $region10: #{tpu_custom_call.1} parent=1 // pred_check
      _
    $region11: #{tpu_custom_call.1} parent=1 // pred_check_branch
      %41 = sbr.rel (0) target = $region13
    $region12: #{tpu_custom_call.1} parent=1 // pred_region
      %s43 = ssub.s32 512, 512
      %44 = vsyncadd [#allocation6], %s43
      %s45 = sshll.u32 [#allocation7], 4
      %s46 = int_to_ptr.vmem [resolvable:$true] %s45
      %51 = dma.hbm_to_vmem [thread:$0]  %s2, 512, %s46, [#allocation6], 128, 128, 8
    $region13: #{tpu_custom_call.1} parent=1 // pred_fallthru
      _
    // Predicated region
    $region14: #{tpu_custom_call.1} parent=1 // pred_check
      _
    $region15: #{tpu_custom_call.1} parent=1 // pred_check_branch
      %53 = sbr.rel (0) target = $region17
    $region16: #{tpu_custom_call.1} parent=1 // pred_region
      %s55 = ssub.s32 512, 512
      %56 = vsyncadd [#allocation9], %s55
      %s57 = sshll.u32 [#allocation8], 4
      %s58 = int_to_ptr.vmem [resolvable:$true] %s57
      %63 = dma.hbm_to_vmem [thread:$0]  %s3, 512, %s58, [#allocation9], 128, 128, 8
    $region17: #{tpu_custom_call.1} parent=1 // pred_fallthru
      _
    // Predicated region
    $region18: #{tpu_custom_call.1} parent=1 // pred_check
      _
    $region19: #{tpu_custom_call.1} parent=1 // pred_check_branch
      %65 = sbr.rel (0) target = $region21
    $region20: #{tpu_custom_call.1} parent=1 // pred_region
      %66 = dma.done [#allocation3], 128
    $region21: #{tpu_custom_call.1} parent=1 // pred_fallthru
      _
    // Predicated region
    $region22: #{tpu_custom_call.1} parent=1 // pred_check
      _
    $region23: #{tpu_custom_call.1} parent=1 // pred_check_branch
      %68 = sbr.rel (0) target = $region25
    $region24: #{tpu_custom_call.1} parent=1 // pred_region
      %69 = dma.done [#allocation6], 128
    $region25: #{tpu_custom_call.1} parent=1 // pred_fallthru
      _
    // Predicated region
    $region26: #{tpu_custom_call.1} parent=1 // pred_check
      _
    $region27: #{tpu_custom_call.1} parent=1 // pred_check_branch
      %71 = sbr.rel (0) target = $region29
    $region28: #{tpu_custom_call.1} parent=1 // pred_region
      %72 = dma.done [#allocation6], 512
    $region29: #{tpu_custom_call.1} parent=1 // pred_fallthru
      _
    // Predicated region
    $region30: #{tpu_custom_call.1} parent=1 // pred_check
      _
    $region31: #{tpu_custom_call.1} parent=1 // pred_check_branch
      %74 = sbr.rel (0) target = $region33
    $region32: #{tpu_custom_call.1} parent=1 // pred_region
      %75 = dma.done [#allocation9], 512
    $region33: #{tpu_custom_call.1} parent=1 // pred_fallthru
      _
    %v76 = vld [vmem:[#allocation2] sm:$0x3]
    %v79 = vunpack.c.l.s4 1966171168
    %v80 = vunpack.c.0.s8 %v79
    %v81 = vlaneseq
    %v82 = vshrl.u32 %v81, 7
    %v83 = vsub.s32 %v80, %v82
    %v84 = vrot.slane %v76, %v83
    %v85 = vcombine.high %v84, %v84
    %v87 = vunpack.c.l.s4 1966171168
    %v88 = vunpack.c.0.s8 %v87
    %v89 = vlaneseq
    %v90 = vshrl.u32 %v89, 7
    %v91 = vsub.s32 %v88, %v90
    %v92 = vrot.slane %v84, %v91
    %v94 = vunpack.c.l.s4 1966171168
    %v95 = vunpack.c.0.s8 %v94
    %v96 = vlaneseq
    %v97 = vshrl.u32 %v96, 7
    %v98 = vsub.s32 %v95, %v97
    %v99 = vrot.slane %v85, %v98
    %v100 = vld [vmem:[#allocation5] sm:$0x3]
    %v103 = vunpack.c.l.s4 1966171168
    %v104 = vunpack.c.0.s8 %v103
    %v105 = vlaneseq
    %v106 = vshrl.u32 %v105, 7
    %v107 = vsub.s32 %v104, %v106
    %v108 = vrot.slane %v100, %v107
    %v109 = vcombine.high %v108, %v108
    %v111 = vunpack.c.l.s4 1966171168
    %v112 = vunpack.c.0.s8 %v111
    %v113 = vlaneseq
    %v114 = vshrl.u32 %v113, 7
    %v115 = vsub.s32 %v112, %v114
    %v116 = vrot.slane %v108, %v115
    %v118 = vunpack.c.l.s4 1966171168
    %v119 = vunpack.c.0.s8 %v118
    %v120 = vlaneseq
    %v121 = vshrl.u32 %v120, 7
    %v122 = vsub.s32 %v119, %v121
    %v123 = vrot.slane %v109, %v122
    %v124 = vld [vmem:[#allocation7] sm:$0xff]
    %v125 = vld [vmem:[#allocation8] sm:$0xff]
    %v126 = vlaneseq
    %v127 = vshrl.u32 %v126, 7
    %v128 = vsub.s32 0, %v127
    %v129 = vrot.slane %v92, %v128
    %v130 = vlaneseq
    %v131 = vshrl.u32 %v130, 7
    %v132 = vsub.s32 0, %v131
    %v133 = vrot.slane %v99, %v132
    %v136 = vmul.f32 %v129, %v124
    %v137 = vmul.f32 %v133, %v124
    %v138 = vlaneseq
    %v139 = vshrl.u32 %v138, 7
    %v140 = vsub.s32 0, %v139
    %v141 = vrot.slane %v116, %v140
    %v142 = vlaneseq
    %v143 = vshrl.u32 %v142, 7
    %v144 = vsub.s32 0, %v143
    %v145 = vrot.slane %v123, %v144
    %v148 = vmul.f32 %v141, %v125
    %v149 = vmul.f32 %v145, %v125
    %v150 = vsub.f32 %v136, %v148
    %v151 = vsub.f32 %v137, %v149
    %v152 = vadd.f32 %v150, 0.0
    %v153 = vadd.f32 %v151, 0.0
    %v154 = vmul.f32 %v129, %v125
    %v155 = vmul.f32 %v133, %v125
    %v156 = vmul.f32 %v141, %v124
    %v157 = vmul.f32 %v145, %v124
    %v158 = vadd.f32 %v154, %v156
    %v159 = vadd.f32 %v155, %v157
    %v160 = vadd.f32 %v158, 0.0
    %v161 = vadd.f32 %v159, 0.0
    %s162 = scalar_lea.vmem [#allocation2], 2
    %v163 = vld [vmem:[%s162] sm:$0x3]
    %v166 = vunpack.c.l.s4 1966171168
    %v167 = vunpack.c.0.s8 %v166
    %v168 = vlaneseq
    %v169 = vshrl.u32 %v168, 7
    %v170 = vsub.s32 %v167, %v169
    %v171 = vrot.slane %v163, %v170
    %v172 = vcombine.high %v171, %v171
    %v174 = vunpack.c.l.s4 1966171168
    %v175 = vunpack.c.0.s8 %v174
    %v176 = vlaneseq
    %v177 = vshrl.u32 %v176, 7
    %v178 = vsub.s32 %v175, %v177
    %v179 = vrot.slane %v171, %v178
    %v181 = vunpack.c.l.s4 1966171168
    %v182 = vunpack.c.0.s8 %v181
    %v183 = vlaneseq
    %v184 = vshrl.u32 %v183, 7
    %v185 = vsub.s32 %v182, %v184
    %v186 = vrot.slane %v172, %v185
    %s187 = scalar_lea.vmem [#allocation5], 2
    %v188 = vld [vmem:[%s187] sm:$0x3]
    %v191 = vunpack.c.l.s4 1966171168
    %v192 = vunpack.c.0.s8 %v191
    %v193 = vlaneseq
    %v194 = vshrl.u32 %v193, 7
    %v195 = vsub.s32 %v192, %v194
    %v196 = vrot.slane %v188, %v195
    %v197 = vcombine.high %v196, %v196
    %v199 = vunpack.c.l.s4 1966171168
    %v200 = vunpack.c.0.s8 %v199
    %v201 = vlaneseq
    %v202 = vshrl.u32 %v201, 7
    %v203 = vsub.s32 %v200, %v202
    %v204 = vrot.slane %v196, %v203
    %v206 = vunpack.c.l.s4 1966171168
    %v207 = vunpack.c.0.s8 %v206
    %v208 = vlaneseq
    %v209 = vshrl.u32 %v208, 7
    %v210 = vsub.s32 %v207, %v209
    %v211 = vrot.slane %v197, %v210
    %s212 = scalar_lea.vmem [#allocation7], 8
    %v213 = vld [vmem:[%s212] sm:$0xff]
    %s214 = scalar_lea.vmem [#allocation8], 8
    %v215 = vld [vmem:[%s214] sm:$0xff]
    %v216 = vlaneseq
    %v217 = vshrl.u32 %v216, 7
    %v218 = vsub.s32 0, %v217
    %v219 = vrot.slane %v179, %v218
    %v220 = vlaneseq
    %v221 = vshrl.u32 %v220, 7
    %v222 = vsub.s32 0, %v221
    %v223 = vrot.slane %v186, %v222
    %v226 = vmul.f32 %v219, %v213
    %v227 = vmul.f32 %v223, %v213
    %v228 = vlaneseq
    %v229 = vshrl.u32 %v228, 7
    %v230 = vsub.s32 0, %v229
    %v231 = vrot.slane %v204, %v230
    %v232 = vlaneseq
    %v233 = vshrl.u32 %v232, 7
    %v234 = vsub.s32 0, %v233
    %v235 = vrot.slane %v211, %v234
    %v238 = vmul.f32 %v231, %v215
    %v239 = vmul.f32 %v235, %v215
    %v240 = vsub.f32 %v226, %v238
    %v241 = vsub.f32 %v227, %v239
    %v242 = vadd.f32 %v152, %v240
    %v243 = vadd.f32 %v153, %v241
    %v244 = vmul.f32 %v219, %v215
    %v245 = vmul.f32 %v223, %v215
    %v246 = vmul.f32 %v231, %v213
    %v247 = vmul.f32 %v235, %v213
    %v248 = vadd.f32 %v244, %v246
    %v249 = vadd.f32 %v245, %v247
    %v250 = vadd.f32 %v160, %v248
    %v251 = vadd.f32 %v161, %v249
    %s252 = scalar_lea.vmem [#allocation2], 4
    %v253 = vld [vmem:[%s252] sm:$0x3]
    %v256 = vunpack.c.l.s4 1966171168
    %v257 = vunpack.c.0.s8 %v256
    %v258 = vlaneseq
    %v259 = vshrl.u32 %v258, 7
    %v260 = vsub.s32 %v257, %v259
    %v261 = vrot.slane %v253, %v260
    %v262 = vcombine.high %v261, %v261
    %v264 = vunpack.c.l.s4 1966171168
    %v265 = vunpack.c.0.s8 %v264
    %v266 = vlaneseq
    %v267 = vshrl.u32 %v266, 7
    %v268 = vsub.s32 %v265, %v267
    %v269 = vrot.slane %v261, %v268
    %v271 = vunpack.c.l.s4 1966171168
    %v272 = vunpack.c.0.s8 %v271
    %v273 = vlaneseq
    %v274 = vshrl.u32 %v273, 7
    %v275 = vsub.s32 %v272, %v274
    %v276 = vrot.slane %v262, %v275
    %s277 = scalar_lea.vmem [#allocation5], 4
    %v278 = vld [vmem:[%s277] sm:$0x3]
    %v281 = vunpack.c.l.s4 1966171168
    %v282 = vunpack.c.0.s8 %v281
    %v283 = vlaneseq
    %v284 = vshrl.u32 %v283, 7
    %v285 = vsub.s32 %v282, %v284
    %v286 = vrot.slane %v278, %v285
    %v287 = vcombine.high %v286, %v286
    %v289 = vunpack.c.l.s4 1966171168
    %v290 = vunpack.c.0.s8 %v289
    %v291 = vlaneseq
    %v292 = vshrl.u32 %v291, 7
    %v293 = vsub.s32 %v290, %v292
    %v294 = vrot.slane %v286, %v293
    %v296 = vunpack.c.l.s4 1966171168
    %v297 = vunpack.c.0.s8 %v296
    %v298 = vlaneseq
    %v299 = vshrl.u32 %v298, 7
    %v300 = vsub.s32 %v297, %v299
    %v301 = vrot.slane %v287, %v300
    %s302 = scalar_lea.vmem [#allocation7], 16
    %v303 = vld [vmem:[%s302] sm:$0xff]
    %s304 = scalar_lea.vmem [#allocation8], 16
    %v305 = vld [vmem:[%s304] sm:$0xff]
    %v306 = vlaneseq
    %v307 = vshrl.u32 %v306, 7
    %v308 = vsub.s32 0, %v307
    %v309 = vrot.slane %v269, %v308
    %v310 = vlaneseq
    %v311 = vshrl.u32 %v310, 7
    %v312 = vsub.s32 0, %v311
    %v313 = vrot.slane %v276, %v312
    %v316 = vmul.f32 %v309, %v303
    %v317 = vmul.f32 %v313, %v303
    %v318 = vlaneseq
    %v319 = vshrl.u32 %v318, 7
    %v320 = vsub.s32 0, %v319
    %v321 = vrot.slane %v294, %v320
    %v322 = vlaneseq
    %v323 = vshrl.u32 %v322, 7
    %v324 = vsub.s32 0, %v323
    %v325 = vrot.slane %v301, %v324
    %v328 = vmul.f32 %v321, %v305
    %v329 = vmul.f32 %v325, %v305
    %v330 = vsub.f32 %v316, %v328
    %v331 = vsub.f32 %v317, %v329
    %v332 = vadd.f32 %v242, %v330
    %v333 = vadd.f32 %v243, %v331
    %v334 = vmul.f32 %v309, %v305
    %v335 = vmul.f32 %v313, %v305
    %v336 = vmul.f32 %v321, %v303
    %v337 = vmul.f32 %v325, %v303
    %v338 = vadd.f32 %v334, %v336
    %v339 = vadd.f32 %v335, %v337
    %v340 = vadd.f32 %v250, %v338
    %v341 = vadd.f32 %v251, %v339
    %s342 = scalar_lea.vmem [#allocation2], 6
    %v343 = vld [vmem:[%s342] sm:$0x3]
    %v346 = vunpack.c.l.s4 1966171168
    %v347 = vunpack.c.0.s8 %v346
    %v348 = vlaneseq
    %v349 = vshrl.u32 %v348, 7
    %v350 = vsub.s32 %v347, %v349
    %v351 = vrot.slane %v343, %v350
    %v352 = vcombine.high %v351, %v351
    %v354 = vunpack.c.l.s4 1966171168
    %v355 = vunpack.c.0.s8 %v354
    %v356 = vlaneseq
    %v357 = vshrl.u32 %v356, 7
    %v358 = vsub.s32 %v355, %v357
    %v359 = vrot.slane %v351, %v358
    %v361 = vunpack.c.l.s4 1966171168
    %v362 = vunpack.c.0.s8 %v361
    %v363 = vlaneseq
    %v364 = vshrl.u32 %v363, 7
    %v365 = vsub.s32 %v362, %v364
    %v366 = vrot.slane %v352, %v365
    %s367 = scalar_lea.vmem [#allocation5], 6
    %v368 = vld [vmem:[%s367] sm:$0x3]
    %v371 = vunpack.c.l.s4 1966171168
    %v372 = vunpack.c.0.s8 %v371
    %v373 = vlaneseq
    %v374 = vshrl.u32 %v373, 7
    %v375 = vsub.s32 %v372, %v374
    %v376 = vrot.slane %v368, %v375
    %v377 = vcombine.high %v376, %v376
    %v379 = vunpack.c.l.s4 1966171168
    %v380 = vunpack.c.0.s8 %v379
    %v381 = vlaneseq
    %v382 = vshrl.u32 %v381, 7
    %v383 = vsub.s32 %v380, %v382
    %v384 = vrot.slane %v376, %v383
    %v386 = vunpack.c.l.s4 1966171168
    %v387 = vunpack.c.0.s8 %v386
    %v388 = vlaneseq
    %v389 = vshrl.u32 %v388, 7
    %v390 = vsub.s32 %v387, %v389
    %v391 = vrot.slane %v377, %v390
    %s392 = scalar_lea.vmem [#allocation7], 24
    %v393 = vld [vmem:[%s392] sm:$0xff]
    %s394 = scalar_lea.vmem [#allocation8], 24
    %v395 = vld [vmem:[%s394] sm:$0xff]
    %v396 = vlaneseq
    %v397 = vshrl.u32 %v396, 7
    %v398 = vsub.s32 0, %v397
    %v399 = vrot.slane %v359, %v398
    %v400 = vlaneseq
    %v401 = vshrl.u32 %v400, 7
    %v402 = vsub.s32 0, %v401
    %v403 = vrot.slane %v366, %v402
    %v406 = vmul.f32 %v399, %v393
    %v407 = vmul.f32 %v403, %v393
    %v408 = vlaneseq
    %v409 = vshrl.u32 %v408, 7
    %v410 = vsub.s32 0, %v409
    %v411 = vrot.slane %v384, %v410
    %v412 = vlaneseq
    %v413 = vshrl.u32 %v412, 7
    %v414 = vsub.s32 0, %v413
    %v415 = vrot.slane %v391, %v414
    %v418 = vmul.f32 %v411, %v395
    %v419 = vmul.f32 %v415, %v395
    %v420 = vsub.f32 %v406, %v418
    %v421 = vsub.f32 %v407, %v419
    %v422 = vadd.f32 %v332, %v420
    %v423 = vadd.f32 %v333, %v421
    %v424 = vmul.f32 %v399, %v395
    %v425 = vmul.f32 %v403, %v395
    %v426 = vmul.f32 %v411, %v393
    %v427 = vmul.f32 %v415, %v393
    %v428 = vadd.f32 %v424, %v426
    %v429 = vadd.f32 %v425, %v427
    %v430 = vadd.f32 %v340, %v428
    %v431 = vadd.f32 %v341, %v429
    %432 = vst [vmem:[#allocation10] sm:$0xff] %v422
    %433 = vst [vmem:[#allocation10 + $0x8] sm:$0xff] %v423
    %434 = vst [vmem:[#allocation11] sm:$0xff] %v430
    %435 = vst [vmem:[#allocation11 + $0x8] sm:$0xff] %v431
    // Predicated region
    $region34: #{tpu_custom_call.1} parent=1 // pred_check
      _
    $region35: #{tpu_custom_call.1} parent=1 // pred_check_branch
      %437 = sbr.rel (0) target = $region37
    $region36: #{tpu_custom_call.1} parent=1 // pred_region
      %s439 = ssub.s32 256, 256
      %440 = vsyncadd [#allocation4], %s439
      %s441 = sshll.u32 [#allocation10], 4
      %s442 = int_to_ptr.vmem [resolvable:$true] %s441
      %447 = dma.vmem_to_hbm [thread:$0]  %s442, 256, %s4, [#allocation4], 128, 128, 8
    $region37: #{tpu_custom_call.1} parent=1 // pred_fallthru
      _
    // Predicated region
    $region38: #{tpu_custom_call.1} parent=1 // pred_check
      _
    $region39: #{tpu_custom_call.1} parent=1 // pred_check_branch
      %449 = sbr.rel (0) target = $region41
    $region40: #{tpu_custom_call.1} parent=1 // pred_region
      %s451 = ssub.s32 256, 256
      %452 = vsyncadd [#allocation12], %s451
      %s453 = sshll.u32 [#allocation11], 4
      %s454 = int_to_ptr.vmem [resolvable:$true] %s453
      %459 = dma.vmem_to_hbm [thread:$0]  %s454, 256, %s5, [#allocation12], 128, 128, 8
    $region41: #{tpu_custom_call.1} parent=1 // pred_fallthru
      _
    // Predicated region
    $region42: #{tpu_custom_call.1} parent=1 // pred_check
      _
    $region43: #{tpu_custom_call.1} parent=1 // pred_check_branch
      %461 = sbr.rel (0) target = $region45
    $region44: #{tpu_custom_call.1} parent=1 // pred_region
      %462 = dma.done [#allocation4], 256
    $region45: #{tpu_custom_call.1} parent=1 // pred_fallthru
      _
    // Predicated region
    $region46: #{tpu_custom_call.1} parent=1 // pred_check
      _
    $region47: #{tpu_custom_call.1} parent=1 // pred_check_branch
      %464 = sbr.rel (0) target = $region49
    $region48: #{tpu_custom_call.1} parent=1 // pred_region
      %465 = dma.done [#allocation12], 256
    $region49: #{tpu_custom_call.1} parent=1 // pred_fallthru
      _
    %466 = vsyncpa [#allocation3], 1
    %467 = vsyncpa [#allocation6], 1
    %468 = vsyncpa [#allocation9], 1
    %469 = vsyncpa [#allocation4], 1
    %470 = vsyncpa [#allocation12], 1

</llo_original>
